<compile_context>
chip_gen: v7x
topology: tpu7x:2x2x1
jax: 0.10.0
libtpu: 0.0.40
codegen_flags: <defaults>
</compile_context>

<pallas_src>
import functools
import math

import jax
import jax.numpy as jnp
from jax.experimental import pallas as pl
from jax.experimental.pallas import tpu as pltpu


def _round_up(x, m):
    return (x + m - 1) // m * m


# -----------------------------------------------------------------------------
# Generic tiled linear kernel:  out = x @ w (+ b)
# grid = (M tiles "parallel", K tiles "arbitrary"); f32 VMEM accumulator;
# bf16 operands, f32 accumulation + bias, bf16 (lane-padded) output store.
# -----------------------------------------------------------------------------
def _linear_kernel(x_ref, w_ref, b_ref, o_ref, acc_ref):
    @pl.when(pl.program_id(1) == 0)
    def _init():
        acc_ref[...] = jnp.zeros_like(acc_ref)

    acc_ref[...] += jnp.dot(x_ref[...], w_ref[...],
                            preferred_element_type=jnp.float32)

    @pl.when(pl.program_id(1) == pl.num_programs(1) - 1)
    def _finalize():
        o_ref[...] = (acc_ref[...] + b_ref[...]).astype(o_ref.dtype)


def linear_pallas(x, w, b=None, *, tm=256, tk=512, out_dtype=jnp.bfloat16):
    """x: (M, K), w: (K, N) laid out (in, out), b: (N,) or None."""
    M, K = x.shape
    N = w.shape[1]
    if b is None:
        b = jnp.zeros((N,), jnp.float32)

    # Lane-dense output: pad N up to a multiple of 128.
    Np = _round_up(N, 128)
    # Row tiling (TM capped at `tm`, multiple of 16 for bf16 sublanes).
    TM = min(tm, _round_up(M, 16))
    Mp = _round_up(M, TM)
    # K tiling only when K is large; otherwise a single full-K tile.
    if K > tk:
        TK = tk                      # tk must be a multiple of 128
        Kp = _round_up(K, TK)
    else:
        TK = K
        Kp = K

    xp = x
    if (Mp, Kp) != (M, K):
        xp = jnp.pad(x, ((0, Mp - M), (0, Kp - K)))
    wp = w
    if (Kp, Np) != (K, N):
        wp = jnp.pad(w, ((0, Kp - K), (0, Np - N)))
    bp = (b if Np == N else jnp.pad(b, (0, Np - N))).astype(jnp.float32).reshape(1, Np)

    # bf16 MXU operands, f32 accumulation in-kernel.
    xp = xp.astype(jnp.bfloat16)
    wp = wp.astype(jnp.bfloat16)

    out_bytes = jnp.dtype(out_dtype).itemsize
    # Explicit scoped-VMEM budget: double-buffered ins/outs + accumulator, 2x headroom,
    # floored at 32 MiB and capped at 64 MiB (v7x physical).
    vmem_need = (2 * TM * TK * 2 + 2 * TK * Np * 2 + 2 * Np * 4
                 + 2 * TM * Np * out_bytes + TM * Np * 4)
    vmem_limit = int(min(max(2 * vmem_need, 32 * 1024 * 1024), 64 * 1024 * 1024))

    cost = pl.CostEstimate(
        flops=int(2 * Mp * Kp * Np),
        transcendentals=0,
        bytes_accessed=int(2 * Mp * Kp + 2 * Kp * Np + out_bytes * Mp * Np + 4 * Np),
    )

    out = pl.pallas_call(
        _linear_kernel,
        out_shape=jax.ShapeDtypeStruct((Mp, Np), out_dtype),
        grid_spec=pltpu.PrefetchScalarGridSpec(
            num_scalar_prefetch=0,
            grid=(Mp // TM, Kp // TK),
            in_specs=[
                pl.BlockSpec((TM, TK), lambda i, k: (i, k)),   # x streams over M and K
                pl.BlockSpec((TK, Np), lambda i, k: (k, 0)),   # weight streams over K only
                pl.BlockSpec((1, Np), lambda i, k: (0, 0)),    # bias stays resident
            ],
            out_specs=pl.BlockSpec((TM, Np), lambda i, k: (i, 0)),
            scratch_shapes=[pltpu.VMEM((TM, Np), jnp.float32)],
        ),
        compiler_params=pltpu.CompilerParams(
            dimension_semantics=("parallel", "arbitrary"),
            vmem_limit_bytes=vmem_limit,
        ),
        cost_estimate=cost,
    )(xp, wp, bp)
    return out[:M, :N]


def linear_ref(x, w, b=None, *, mirror_bf16=True, out_dtype=jnp.bfloat16):
    if not mirror_bf16:
        out_dtype = jnp.float32
    else:
        x = x.astype(jnp.bfloat16)
        w = w.astype(jnp.bfloat16)
    y = jnp.dot(x, w, preferred_element_type=jnp.float32,
                precision=jax.lax.Precision.HIGHEST)
    if b is not None:
        y = y + b.astype(jnp.float32)
    return y.astype(out_dtype)


# -----------------------------------------------------------------------------
# Fused attention core: p = softmax(scale * q k^T); head = p @ v.
# All (head, batch) pairs are processed in a single grid step (the whole problem
# is ~tens of KB at these shapes). Only the query-row-0 probabilities are written
# (that is all attn_map consumes); the full softmax matrix never touches HBM.
# -----------------------------------------------------------------------------
def _attention_kernel(q_ref, k_ref, v_ref, attn0_ref, head_ref, *, scale):
    q = q_ref[...]                                                  # (MB, nq, d) bf16
    k = k_ref[...]                                                  # (MB, nk, d) bf16
    v = v_ref[...]                                                  # (MB, nk, d) bf16
    s = jnp.einsum("bqd,bkd->bqk", q, k,
                   preferred_element_type=jnp.float32) * scale      # (MB, nq, nk) f32
    m = jnp.max(s, axis=-1, keepdims=True)
    e = jnp.exp(s - m)
    inv = pl.reciprocal(jnp.sum(e, axis=-1, keepdims=True), approx=True)
    p = e * inv                                                      # f32 softmax
    attn0_ref[...] = p[:, 0:1, :]                                    # only query row 0
    head_ref[...] = jnp.einsum("bqk,bkd->bqd", p.astype(jnp.bfloat16), v,
                               preferred_element_type=jnp.float32)


def attention_pallas(q, k, v, scale):
    """q: (MB, nq, d), k/v: (MB, nk, d). Returns (attn_row0 (MB, nk), head (MB, nq, d))."""
    MB, nq, d = q.shape
    nk = k.shape[1]
    # Explicit shape coupling (module semantics require graph_size == n_query).
    assert v.shape[1] == nk and v.shape[2] == d, "attention requires k/v with matching (nk, d)"

    qb = q.astype(jnp.bfloat16)
    kb = k.astype(jnp.bfloat16)
    vb = v.astype(jnp.bfloat16)

    kernel = functools.partial(_attention_kernel, scale=float(scale))
    cost = pl.CostEstimate(
        flops=int(4 * MB * nq * nk * d),
        transcendentals=int(MB * nq * (nk + 1)),
        bytes_accessed=int(2 * MB * (nq * d + 2 * nk * d) + 4 * MB * (nq * d + nk)),
    )
    attn0, head = pl.pallas_call(
        kernel,
        out_shape=(
            jax.ShapeDtypeStruct((MB, 1, nk), jnp.float32),
            jax.ShapeDtypeStruct((MB, nq, d), jnp.float32),
        ),
        grid_spec=pltpu.PrefetchScalarGridSpec(
            num_scalar_prefetch=0,
            grid=(1,),                                   # whole problem in one step
            in_specs=[
                pl.BlockSpec((MB, nq, d), lambda i: (0, 0, 0)),
                pl.BlockSpec((MB, nk, d), lambda i: (0, 0, 0)),
                pl.BlockSpec((MB, nk, d), lambda i: (0, 0, 0)),
            ],
            out_specs=[
                pl.BlockSpec((MB, 1, nk), lambda i: (0, 0, 0)),
                pl.BlockSpec((MB, nq, d), lambda i: (0, 0, 0)),
            ],
        ),
        compiler_params=pltpu.CompilerParams(
            dimension_semantics=("arbitrary",),          # single step; no megacore split
        ),
        cost_estimate=cost,
    )(qb, kb, vb)
    return attn0[:, 0, :], head


def attention_ref(q, k, v, scale, *, mirror_bf16=True):
    qq = q.astype(jnp.bfloat16) if mirror_bf16 else q.astype(jnp.float32)
    kk = k.astype(jnp.bfloat16) if mirror_bf16 else k.astype(jnp.float32)
    vv = v.astype(jnp.bfloat16) if mirror_bf16 else v.astype(jnp.float32)
    s = jnp.einsum("bqd,bkd->bqk", qq, kk, preferred_element_type=jnp.float32,
                   precision=jax.lax.Precision.HIGHEST) * scale
    m = jnp.max(s, axis=-1, keepdims=True)
    e = jnp.exp(s - m)
    p = e / jnp.sum(e, axis=-1, keepdims=True)
    pv = p.astype(jnp.bfloat16) if mirror_bf16 else p
    head = jnp.einsum("bqk,bkd->bqd", pv, vv, preferred_element_type=jnp.float32,
                      precision=jax.lax.Precision.HIGHEST)
    return p[:, 0, :].astype(jnp.float32), head


# -----------------------------------------------------------------------------
# JAX glue replicating the PyTorch helpers used by forward()
# -----------------------------------------------------------------------------
def generate_ref_points(width, height):
    gy, gx = jnp.meshgrid(jnp.arange(height, dtype=jnp.float32),
                          jnp.arange(width, dtype=jnp.float32), indexing="ij")
    gy = gy / (height - 1)
    gx = gx / (width - 1)
    return jnp.stack([gx, gy], axis=2)                            # (h, w, 2)


def l2_normalize(x, axis, eps=1e-12):
    # torch.nn.functional.normalize(p=2, dim=axis)
    n = jnp.sqrt(jnp.sum(x * x, axis=axis, keepdims=True))
    return x / jnp.maximum(n, eps)


def grid_sample_bilinear_zeros(inp, grid):
    """F.grid_sample(inp, grid, mode='bilinear', padding_mode='zeros', align_corners=False).
    inp: (N, C, Hin, Win); grid: (N, Hout, Wout, 2), last dim (x, y) in [-1, 1]."""
    N, C, Hin, Win = inp.shape
    ix = ((grid[..., 0] + 1.0) * Win - 1.0) * 0.5
    iy = ((grid[..., 1] + 1.0) * Hin - 1.0) * 0.5
    ix0 = jnp.floor(ix)
    iy0 = jnp.floor(iy)
    ix1 = ix0 + 1.0
    iy1 = iy0 + 1.0
    wx1 = ix - ix0
    wx0 = 1.0 - wx1
    wy1 = iy - iy0
    wy0 = 1.0 - wy1
    n_idx = jnp.arange(N)[:, None, None]

    def tap(iy_f, ix_f):
        valid = ((iy_f >= 0.0) & (iy_f <= Hin - 1.0) &
                 (ix_f >= 0.0) & (ix_f <= Win - 1.0))
        iy_c = jnp.clip(iy_f, 0.0, Hin - 1.0).astype(jnp.int32)
        ix_c = jnp.clip(ix_f, 0.0, Win - 1.0).astype(jnp.int32)
        vals = inp[n_idx, :, iy_c, ix_c]                          # (N, Hout, Wout, C)
        return jnp.where(valid[..., None], vals, 0.0)

    out = (tap(iy0, ix0) * (wy0 * wx0)[..., None] +
           tap(iy0, ix1) * (wy0 * wx1)[..., None] +
           tap(iy1, ix0) * (wy1 * wx0)[..., None] +
           tap(iy1, ix1) * (wy1 * wx1)[..., None])
    return jnp.transpose(out, (0, 3, 1, 2))                       # (N, C, Hout, Wout)


def deformable_sample(k4, deltas7, height, width):
    """Vectorized replacement of the module's K_num * n_query grid_sample loop.
    k4: (M, B, nq, vd); deltas7: (1, M, h, w, nq, Knum, 2) -> k_att (M, B, Knum*nq, vd)."""
    M, B, nq, vd = k4.shape
    Knum = deltas7.shape[5]
    ref_pt = generate_ref_points(width, height)                          # (h, w, 2)
    d_t = jnp.transpose(deltas7[0].astype(jnp.float32),
                        (4, 3, 0, 1, 2, 5))                              # (Knum, nq, M, h, w, 2)
    g = ref_pt[None, None, None] + d_t
    vgrid = jnp.stack([l2_normalize(g[..., 0], axis=3),                  # normalize over h
                       l2_normalize(g[..., 1], axis=3)], axis=-1)        # (Knum, nq, M, h, w, 2)
    feats = jnp.transpose(k4.reshape(M, height, width, nq, vd).astype(jnp.float32),
                          (3, 0, 4, 1, 2))                               # (nq, M, vd, h, w)
    sample_s = jax.vmap(grid_sample_bilinear_zeros)                      # over n_query
    sample_ks = jax.vmap(sample_s, in_axes=(None, 0))                    # over K_num (shared feats)
    sampled = sample_ks(feats, vgrid)                                    # (Knum, nq, M, vd, h, w)
    # Matches torch stack order (k-major, s-minor) then permute(0,2,3,4,1).view(...)
    k_att = jnp.transpose(sampled, (2, 4, 5, 0, 1, 3)).reshape(M, height * width, Knum * nq, vd)
    return k_att


# -----------------------------------------------------------------------------
# Full MultiHeadAttention forward (eval mode), Pallas or pure-JAX implementation
# -----------------------------------------------------------------------------
def mha_forward(params, q_in, h_in=None, *, use_pallas=True, mirror_bf16=True):
    if h_in is None:
        h_in = q_in
    B, G, Din = h_in.shape
    nq = q_in.shape[1]
    assert G == nq, "module semantics require graph_size == n_query (q is built from h)"
    Wq, Wk, Wv, Wo = params["Q"], params["K"], params["V"], params["W"]
    H, _, kd = Wq.shape
    vd = Wo.shape[1]
    embed = Wo.shape[2]
    Knum = Wv.shape[2] // vd
    M = H                               # module hard-codes 8 samplers == n_head
    height = int(B ** 0.5)
    width = int(B ** 0.5)
    scale = 1.0 / math.sqrt(kd)

    if use_pallas:
        def linear(x, w, b=None, out_dtype=jnp.bfloat16):
            return linear_pallas(x, w, b, out_dtype=out_dtype)
        attention = attention_pallas
    else:
        def linear(x, w, b=None, out_dtype=jnp.bfloat16):
            return linear_ref(x, w, b, mirror_bf16=mirror_bf16, out_dtype=out_dtype)
        attention = functools.partial(attention_ref, mirror_bf16=mirror_bf16)

    # --- 1. per-head Q/K/V projections, fused into one tiled matmul -------------
    h_flat = h_in.reshape(B * G, Din)    # reference also builds q from h (q_flat = h_flat)
    w_cat = jnp.concatenate(
        [jnp.transpose(Wq, (1, 0, 2)).reshape(Din, H * kd),
         jnp.transpose(Wk, (1, 0, 2)).reshape(Din, H * kd),
         jnp.transpose(Wv, (1, 0, 2)).reshape(Din, H * vd * Knum)], axis=1)
    proj = linear(h_flat, w_cat)         # (B*G, H*(2*kd + vd*Knum)), bf16

    q3 = jnp.transpose(proj[:, :H * kd].reshape(B * G, H, kd), (1, 0, 2))
    k3 = jnp.transpose(proj[:, H * kd:2 * H * kd].reshape(B * G, H, kd), (1, 0, 2))
    v3 = jnp.transpose(proj[:, 2 * H * kd:].reshape(B * G, H, vd * Knum), (1, 0, 2))
    q4 = q3.reshape(H, B, nq, kd)
    k4 = k3.reshape(H, B, G, kd)
    v4 = v3.reshape(H, B, G * Knum, vd)

    # --- 2. sampling offsets via delta_proj Linear -------------------------------
    q_resh = jnp.transpose(q4, (1, 2, 3, 0)).reshape(H, B, nq * kd)
    # deltas feed nonlinear sampling geometry -> keep the (tiny) output in f32.
    deltas = linear(q_resh.reshape(H * B, nq * kd), params["Wd_t"], params["bd"],
                    out_dtype=jnp.float32)
    deltas = deltas.reshape(1, H, height, width, nq, Knum, 2)

    # --- 3. deformable bilinear sampling of K (single vectorized gather) --------
    # TODO(synk): grid_sample-style gather + F.normalize kept in plain (vmapped) JAX;
    # no clean Pallas gather at these tiny (2x2) spatial shapes.
    k_att = deformable_sample(k4, deltas, height, width)      # (M, B, Knum*nq, vd)
    q_att = q_resh.reshape(M, B, nq, vd)

    # --- 4. fused scaled-dot-product attention (Pallas) --------------------------
    attn0, head = attention(q_att.reshape(M * B, nq, vd),
                            k_att.reshape(M * B, Knum * nq, vd),
                            v4.reshape(M * B, G * Knum, vd),
                            scale)
    attn_map = attn0.reshape(M, B, Knum * nq).mean(axis=0)    # == attn.mean(0)[:, 0]
    head = head.reshape(M, B, nq, vd)

    # --- 5. output projection -----------------------------------------------------
    head_flat = jnp.transpose(head, (1, 2, 0, 3)).reshape(B * nq, H * vd)
    out = linear(head_flat, Wo.reshape(H * vd, embed))
    out = out.astype(jnp.float32).reshape(B, nq, embed)
    # TODO(synk): training-time dropout mask omitted (eval-mode forward semantics).
    return out, attn_map


def make_params(key, *, n_head, input_dim, embed_dim, K_num, S=10):
    v_dim = embed_dim // n_head
    k_dim = v_dim
    ks = jax.random.split(key, 6)

    def uni(k, shape):
        bound = 1.0 / math.sqrt(shape[-1])
        return jax.random.uniform(k, shape, jnp.float32, -bound, bound)

    # NOTE: torch zero-inits delta_proj.weight; a small random weight is used here so
    # the kernel path is actually exercised (forward semantics are unchanged).
    Wd = uni(ks[4], (2 * K_num * 10, v_dim * S))      # torch Linear weight (out, in)
    return {
        "Q": uni(ks[0], (n_head, input_dim, k_dim)),
        "K": uni(ks[1], (n_head, input_dim, k_dim)),
        "V": uni(ks[2], (n_head, input_dim, v_dim * K_num)),
        "W": uni(ks[3], (n_head, v_dim, embed_dim)),
        "Wd_t": Wd.T,                                  # pre-transposed to (in, out)
        "bd": jax.random.uniform(ks[5], (2 * K_num * 10,), jnp.float32, -1.0, 1.0),
    }


if __name__ == "__main__":
    # Shapes implied by the module: n_head must equal the hard-coded M=8 samplers,
    # graph_size == n_query == S == 10, and batch must be a perfect square.
    B, G, Din = 4, 10, 32
    n_head, embed_dim, K_num = 8, 32, 3

    key = jax.random.PRNGKey(0)
    kp, kx, k1, k2, k3 = jax.random.split(key, 5)
    params = make_params(kp, n_head=n_head, input_dim=Din,
                         embed_dim=embed_dim, K_num=K_num)
    x = jax.random.normal(kx, (B, G, Din), dtype=jnp.float32)

    # Standalone check of the tiled linear kernel: multiple M tiles AND multiple K
    # tiles (tk=128 at K=256) to exercise the accumulator / finalize path.
    Ml, Kl, Nl = 512, 256, 256
    xs = jax.random.normal(k1, (Ml, Kl), dtype=jnp.float32)
    ws = jax.random.uniform(k2, (Kl, Nl), jnp.float32, -0.0625, 0.0625)
    bs = jax.random.uniform(k3, (Nl,), jnp.float32, -0.0625, 0.0625)
    y_pl = jax.block_until_ready(linear_pallas(xs, ws, bs, tm=256, tk=128))
    y_rf = linear_ref(xs, ws, bs, mirror_bf16=True)
    assert jnp.allclose(y_pl.astype(jnp.float32), y_rf.astype(jnp.float32),
                        atol=1e-2, rtol=1e-2), "tiled linear kernel mismatch"

    # End-to-end MultiHeadAttention forward.
    fwd_pallas = jax.jit(functools.partial(mha_forward, use_pallas=True))
    fwd_ref_bf16 = jax.jit(functools.partial(mha_forward, use_pallas=False, mirror_bf16=True))
    fwd_ref_f32 = jax.jit(functools.partial(mha_forward, use_pallas=False, mirror_bf16=False))

    out_pl, amap_pl = jax.block_until_ready(fwd_pallas(params, x))
    out_bf, amap_bf = fwd_ref_bf16(params, x)
    out_f32, amap_f32 = fwd_ref_f32(params, x)

    # Check vs a JAX reference computing the same math at the same precision policy
    # (bf16 MXU operands / outputs, f32 accumulation). Small slack covers the EUP
    # approximate-reciprocal softmax and MXU-vs-XLA accumulation order.
    assert jnp.allclose(out_pl, out_bf, atol=1.5e-2, rtol=1.5e-2), "out mismatch vs reference"
    assert jnp.allclose(amap_pl, amap_bf, atol=1.5e-2, rtol=1.5e-2), "attn_map mismatch vs reference"

    # Sanity bound vs the full-f32 module semantics (covers deliberate bf16 rounding).
    rel_l2 = float(jnp.sqrt(jnp.sum((out_pl - out_f32) ** 2)) /
                   jnp.sqrt(jnp.sum(out_f32 ** 2)))
    assert rel_l2 < 8e-2, f"out drifted vs f32 reference (rel_l2={rel_l2})"
    assert float(jnp.max(jnp.abs(amap_pl - amap_f32))) < 8e-2, "attn_map drifted vs f32 reference"

    print("KERNEL_OK")
</pallas_src>

<mosaic_0001>
module attributes {stable_mosaic.version = 11 : i64} {
  func.func @_linear_kernel(%arg0: i32, %arg1: i32, %arg2: memref<256x128xbf16, #tpu.memory_space<vmem>>, %arg3: memref<128x256xbf16, #tpu.memory_space<vmem>>, %arg4: memref<1x256xf32, #tpu.memory_space<vmem>>, %arg5: memref<256x256xbf16, #tpu.memory_space<vmem>>, %arg6: memref<256x256xf32, #tpu.memory_space<vmem>>) attributes {dimension_semantics = [#tpu.dimension_semantics<parallel>, #tpu.dimension_semantics<arbitrary>], iteration_bounds = array<i64: 2, 2>, scalar_prefetch = 0 : i64, scratch_operands = 1 : i64, tpu.core_type = #tpu.core_type<tc>, window_params = [{transform_indices = @transform_0, window_bounds = array<i64: 256, 128>}, {transform_indices = @transform_1, window_bounds = array<i64: 128, 256>}, {pipeline_mode = #tpu.pipeline_mode<synchronous>, transform_indices = @transform_2, window_bounds = array<i64: 1, 256>}, {transform_indices = @transform_3, window_bounds = array<i64: 256, 256>}]} {
    %c0_i32 = arith.constant 0 : i32
    %0 = arith.cmpi eq, %arg1, %c0_i32 : i32
    %1 = arith.extui %0 : i1 to i32
    %c0_i32_0 = arith.constant 0 : i32
    %2 = arith.cmpi ne, %1, %c0_i32_0 : i32
    scf.if %2 {
      %cst_9 = arith.constant 0.000000e+00 : f32
      %12 = vector.broadcast %cst_9 : f32 to vector<256x256xf32>
      %c0_10 = arith.constant 0 : index
      %c0_11 = arith.constant 0 : index
      %13 = vector.load %arg6[%c0_10, %c0_11] : memref<256x256xf32, #tpu.memory_space<vmem>>, vector<256x256xf32>
      tpu.vector_store %arg6[%c0_10, %c0_11], %12 {strides = array<i32>} : memref<256x256xf32, #tpu.memory_space<vmem>>, vector<256x256xf32>,
    } else {
    }
    %c0 = arith.constant 0 : index
    %c0_1 = arith.constant 0 : index
    %3 = vector.load %arg6[%c0, %c0_1] : memref<256x256xf32, #tpu.memory_space<vmem>>, vector<256x256xf32>
    %c0_2 = arith.constant 0 : index
    %c0_3 = arith.constant 0 : index
    %4 = vector.load %arg2[%c0_2, %c0_3] : memref<256x128xbf16, #tpu.memory_space<vmem>>, vector<256x128xbf16>
    %c0_4 = arith.constant 0 : index
    %c0_5 = arith.constant 0 : index
    %5 = vector.load %arg3[%c0_4, %c0_5] : memref<128x256xbf16, #tpu.memory_space<vmem>>, vector<128x256xbf16>
    %cst = arith.constant dense<0.000000e+00> : vector<256x256xf32>
    %6 = tpu.matmul %4, %5, %cst {dimension_numbers = #tpu.dot_dimension_numbers<[1], [0], [0], [1], [0, 0, 1, 1], [], []>} : vector<256x128xbf16>, vector<128x256xbf16>, vector<256x256xf32> -> vector<256x256xf32>
    %7 = arith.addf %3, %6 : vector<256x256xf32>
    %c0_6 = arith.constant 0 : index
    %c0_7 = arith.constant 0 : index
    %8 = vector.load %arg6[%c0_6, %c0_7] : memref<256x256xf32, #tpu.memory_space<vmem>>, vector<256x256xf32>
    tpu.vector_store %arg6[%c0_6, %c0_7], %7 {strides = array<i32>} : memref<256x256xf32, #tpu.memory_space<vmem>>, vector<256x256xf32>,
    %c1_i32 = arith.constant 1 : i32
    %9 = arith.cmpi eq, %arg1, %c1_i32 : i32
    %10 = arith.extui %9 : i1 to i32
    %c0_i32_8 = arith.constant 0 : i32
    %11 = arith.cmpi ne, %10, %c0_i32_8 : i32
    scf.if %11 {
      %c0_9 = arith.constant 0 : index
      %c0_10 = arith.constant 0 : index
      %12 = vector.load %arg6[%c0_9, %c0_10] : memref<256x256xf32, #tpu.memory_space<vmem>>, vector<256x256xf32>
      %c0_11 = arith.constant 0 : index
      %c0_12 = arith.constant 0 : index
      %13 = vector.load %arg4[%c0_11, %c0_12] : memref<1x256xf32, #tpu.memory_space<vmem>>, vector<1x256xf32>
      %14 = vector.broadcast %13 : vector<1x256xf32> to vector<256x256xf32>
      %15 = arith.addf %12, %14 : vector<256x256xf32>
      %16 = arith.truncf %15 : vector<256x256xf32> to vector<256x256xbf16>
      %c0_13 = arith.constant 0 : index
      %c0_14 = arith.constant 0 : index
      %17 = vector.load %arg5[%c0_13, %c0_14] : memref<256x256xbf16, #tpu.memory_space<vmem>>, vector<256x256xbf16>
      tpu.vector_store %arg5[%c0_13, %c0_14], %16 {strides = array<i32>} : memref<256x256xbf16, #tpu.memory_space<vmem>>, vector<256x256xbf16>,
    } else {
    }
    return
  }
  func.func @transform_0(%arg0: i32, %arg1: i32) -> (i32, i32) {
    %c0_i32 = arith.constant 0 : i32
    return %arg0, %arg1 : i32, i32
  }
  func.func @transform_1(%arg0: i32, %arg1: i32) -> (i32, i32) {
    %c0_i32 = arith.constant 0 : i32
    %c0_i32_0 = arith.constant 0 : i32
    return %arg1, %c0_i32 : i32, i32
  }
  func.func @transform_2(%arg0: i32, %arg1: i32) -> (i32, i32) {
    %c0_i32 = arith.constant 0 : i32
    %c0_i32_0 = arith.constant 0 : i32
    %c0_i32_1 = arith.constant 0 : i32
    return %c0_i32, %c0_i32_0 : i32, i32
  }
  func.func @transform_3(%arg0: i32, %arg1: i32) -> (i32, i32) {
    %c0_i32 = arith.constant 0 : i32
    %c0_i32_0 = arith.constant 0 : i32
    return %arg0, %c0_i32 : i32, i32
  }
}

</mosaic_0001>

<llo_original>
// kernel: tpu_custom_call.1
$region0: #{tpu_custom_call.1}
  #allocation0 [shape = 'u32[]', space=smem, size = 0x4, offset = 0x4, fixed_abs, tag = 'smem constant byte address 0x4 - core index']
  #allocation1 [shape = 'u32[144,128]{1,0:T(1,128)}', space=vmem, size = 0x12000, scoped, tag = 'internal scratch']
  #allocation2 [shape = 'f32[256,256]{1,0:T(8,128)}', space=vmem, size = 0x40000, scoped, tag = 'scratch operand']
  %s0 = inlined_call_operand.hbm [shape: bf16[512,256], index: 0, kind: input, shape index: {}]
  %s1 = inlined_call_operand.hbm [shape: bf16[256,256], index: 1, kind: input, shape index: {}]
  %s2 = inlined_call_operand.vmem [shape: f32[1,256], index: 2, kind: input, shape index: {}]
  %s3 = inlined_call_operand.hbm [shape: bf16[512,256], index: 3, kind: output, shape index: {}]
  %s4 = sld [smem:[#allocation0]]
  $region61: #{tpu_custom_call.1} parent=0
    _
  %s6 = ssub.s32 1, %s4
  %s7 = scalar_select 0, %s6, %s4
  $region1: #{tpu_custom_call.1} parent=0
    #allocation3 [shape = 'u8[131072]{0}', space=vmem, size = 0x20000, scoped, tag = 'input window, operand 0']
    #allocation4 [shape = 's32[2]{0}', space=sflag, size = 0x8, scoped, tag = 'scoped memory for tpu_custom_call.1']
    #allocation5 [shape = 's32[2]{0}', space=sflag, size = 0x8, scoped, tag = 'scoped memory for tpu_custom_call.1']
    #allocation6 [shape = 'u8[131072]{0}', space=vmem, size = 0x20000, scoped, tag = 'input window, operand 1']
    #allocation7 [shape = 's32[2]{0}', space=sflag, size = 0x8, scoped, tag = 'scoped memory for tpu_custom_call.1']
    #allocation8 [shape = 'u8[262144]{0}', space=vmem, size = 0x40000, scoped, tag = 'output window, operand 0']
    %8 = vsyncpa [#allocation4], 0
    %s9 = scalar_lea.sflag [#allocation4], 1
    %10 = vsyncpa %s9, 0
    %11 = vsyncpa [#allocation7], 0
    %s12 = scalar_lea.sflag [#allocation7], 1
    %13 = vsyncpa %s12, 0
    %14 = vsyncpa [#allocation5], 0
    %s15 = scalar_lea.sflag [#allocation5], 1
    %16 = vsyncpa %s15, 0
    loop: start=0, step=1, limit=6
    $region2: #{tpu_custom_call.1} parent=1 // loop_pre_header
      _
    $region3: #{tpu_custom_call.1} parent=1 // loop_header
      %s18 = sphi 0, %s22
      %p19 = scmp.ge.s32.totalorder %s18, 6
      %s25 = sphi 0, %s37
      %s26 = sphi 0, %s33
      %s27 = sphi 0, %s25
      %s28 = sphi 0, %s26
      %s29 = sphi 0, %s27
      %s30 = sphi 0, %s28
      %s42 = sphi 0, %s44
      %s45 = sphi 0, %s42
      %s46 = sphi 0, %s45
      %s62 = sphi 0, %s46
      %s68 = sphi 0, %s70
      %s71 = sphi 0, %s68
      %s72 = sphi 0, %s71
      %s88 = sphi 0, %s72
      %s92 = sphi 0, %s92
      %s94 = sphi 0, %s92
      %s95 = sphi 0, %s94
      %s109 = sphi 0, %s95
      %s115 = sphi 0, %s117
      %s118 = sphi 0, %s115
      %s119 = sphi 0, %s118
      %s135 = sphi 0, %s119
    $region4: #{tpu_custom_call.1} parent=1 // loop_header_branch
      %21 = sbr.rel (%p19) target = $region8
    $region5: #{tpu_custom_call.1} parent=1 // loop_body
      %s23 = ssub.s32 %s18, 1
      %s24 = ssub.s32 %s18, 2
      %s31 = sadd.s32 1, %s26
      %p32 = scmp.ge.s32.totalorder %s31, 2
      %s33 = scalar_select %p32, 0, %s31
      %s34 = sadd.s32 1, %s25
      %s35 = scalar_select %p32, %s34, %s25
      %p36 = scmp.ge.s32.totalorder %s35, 2
      %s37 = scalar_select %p36, 0, %s35
      %s38 = ssub.s32 %s25, %s37
      %s39 = ssub.s32 %s26, %s33
      %s40 = sor.u32 %s38, %s39
      %p41 = scmp.eq.s32.totalorder %s40, 0
      %s43 = sadd.s32 %s42, 1
      %s44 = scalar_select %p41, %s42, %s43
      %p47 = pneg %p41
      %p48 = scmp.eq.s32.totalorder %s18, 3
      %p49 = por %p47, %p48
      %p50 = scmp.ne.s32.totalorder %s42, %s45
      %p51 = scmp.eq.s32.totalorder %s18, 0
      %p52 = por %p50, %p51
      %p53 = scmp.ne.s32.totalorder %s42, %s45
      %p54 = scmp.eq.s32.totalorder %s23, 3
      %p55 = por %p53, %p54
      %p56 = scmp.ne.s32.totalorder %s45, %s46
      %p57 = scmp.eq.s32.totalorder %s23, 0
      %p58 = por %p56, %p57
      %p59 = scmp.ne.s32.totalorder %s45, %s46
      %p60 = scmp.eq.s32.totalorder %s24, 3
      %p61 = por %p59, %p60
      %p63 = scmp.ne.s32.totalorder %s46, %s62
      %p64 = scmp.eq.s32.totalorder %s24, 0
      %p65 = por %p63, %p64
      %s66 = ssub.s32 %s26, %s33
      %p67 = scmp.eq.s32.totalorder %s66, 0
      %s69 = sadd.s32 %s68, 1
      %s70 = scalar_select %p67, %s68, %s69
      %p73 = pneg %p67
      %p74 = scmp.eq.s32.totalorder %s18, 3
      %p75 = por %p73, %p74
      %p76 = scmp.ne.s32.totalorder %s68, %s71
      %p77 = scmp.eq.s32.totalorder %s18, 0
      %p78 = por %p76, %p77
      %p79 = scmp.ne.s32.totalorder %s68, %s71
      %p80 = scmp.eq.s32.totalorder %s23, 3
      %p81 = por %p79, %p80
      %p82 = scmp.ne.s32.totalorder %s71, %s72
      %p83 = scmp.eq.s32.totalorder %s23, 0
      %p84 = por %p82, %p83
      %p85 = scmp.ne.s32.totalorder %s71, %s72
      %p86 = scmp.eq.s32.totalorder %s24, 3
      %p87 = por %p85, %p86
      %p89 = scmp.ne.s32.totalorder %s72, %s88
      %p90 = scmp.eq.s32.totalorder %s24, 0
      %p91 = por %p89, %p90
      %s93 = sadd.s32 %s92, 1
      %p96 = scmp.eq.s32.totalorder %s18, 3
      %p97 = scmp.ne.s32.totalorder %s92, %s94
      %p98 = scmp.eq.s32.totalorder %s18, 0
      %p99 = por %p97, %p98
      %p100 = scmp.ne.s32.totalorder %s92, %s94
      %p101 = scmp.eq.s32.totalorder %s23, 3
      %p102 = por %p100, %p101
      %p103 = scmp.ne.s32.totalorder %s94, %s95
      %p104 = scmp.eq.s32.totalorder %s23, 0
      %p105 = por %p103, %p104
      %p106 = scmp.ne.s32.totalorder %s94, %s95
      %p107 = scmp.eq.s32.totalorder %s24, 3
      %p108 = por %p106, %p107
      %p110 = scmp.ne.s32.totalorder %s95, %s109
      %p111 = scmp.eq.s32.totalorder %s24, 0
      %p112 = por %p110, %p111
      %s113 = ssub.s32 %s25, %s37
      %p114 = scmp.eq.s32.totalorder %s113, 0
      %s116 = sadd.s32 %s115, 1
      %s117 = scalar_select %p114, %s115, %s116
      %p120 = pneg %p114
      %p121 = scmp.eq.s32.totalorder %s18, 3
      %p122 = por %p120, %p121
      %p123 = scmp.ne.s32.totalorder %s115, %s118
      %p124 = scmp.eq.s32.totalorder %s18, 0
      %p125 = por %p123, %p124
      %p126 = scmp.ne.s32.totalorder %s115, %s118
      %p127 = scmp.eq.s32.totalorder %s23, 3
      %p128 = por %p126, %p127
      %p129 = scmp.ne.s32.totalorder %s118, %s119
      %p130 = scmp.eq.s32.totalorder %s23, 0
      %p131 = por %p129, %p130
      %p132 = scmp.ne.s32.totalorder %s118, %s119
      %p133 = scmp.eq.s32.totalorder %s24, 3
      %p134 = por %p132, %p133
      %p136 = scmp.ne.s32.totalorder %s119, %s135
      %p137 = scmp.eq.s32.totalorder %s24, 0
      %p138 = por %p136, %p137
      %p139 = scmp.le.s32.totalorder 1, %s18
      %p140 = scmp.lt.s32.totalorder %s18, 5
      %p141 = pnand %p139, %p140
      %p142 = pneg %p141
      // Predicated region
      $region9: #{tpu_custom_call.1} parent=5 // pred_check
        _
      $region10: #{tpu_custom_call.1} parent=5 // pred_check_branch
        %144 = sbr.rel (%p141) target = $region12
      $region11: #{tpu_custom_call.1} parent=5 // pred_region
        %s145 = ssub.s32 %s18, 1
        // Predicated region
        $region13: #{tpu_custom_call.1} parent=11 // pred_check
          %p146 = pneg %p105
        $region14: #{tpu_custom_call.1} parent=11 // pred_check_branch
          %148 = sbr.rel (%p146) target = $region16
        $region15: #{tpu_custom_call.1} parent=11 // pred_region
          _
        $region16: #{tpu_custom_call.1} parent=11 // pred_fallthru
          _
      $region12: #{tpu_custom_call.1} parent=5 // pred_fallthru
        _
      %p149 = scmp.lt.s32.totalorder %s18, 4
      // Predicated region
      $region17: #{tpu_custom_call.1} parent=5 // pred_check
        %p150 = pneg %p149
      $region18: #{tpu_custom_call.1} parent=5 // pred_check_branch
        %152 = sbr.rel (%p150) target = $region20
      $region19: #{tpu_custom_call.1} parent=5 // pred_region
        // Predicated region
        $region21: #{tpu_custom_call.1} parent=19 // pred_check
          %p153 = pneg %p52
        $region22: #{tpu_custom_call.1} parent=19 // pred_check_branch
          %155 = sbr.rel (%p153) target = $region24
        $region23: #{tpu_custom_call.1} parent=19 // pred_region
          %s156 = sand.u32 %s42, 1
          %s157 = scalar_lea.sflag [#allocation4], %s156
          %s158 = sand.u32 %s42, 1
          %s159 = smul.addr %s158, 128
          %s160 = scalar_lea.vmem [#allocation3], %s159
          %s161 = smul.u32 32, %s25
          %s163 = ssub.s32 2048, 2048
          %164 = vsyncadd %s157, %s163
          %s165 = smul.addr %s161, 2
          %s166 = sadd.s32 %s26, %s165
          %s167 = smul.addr %s166, 64
          %s168 = scalar_lea.hbm %s0, %s167
          %s169 = sshll.u32 %s160, 4
          %s170 = int_to_ptr.vmem [resolvable:$true] %s169
          %175 = dma.hbm_to_vmem [thread:$0]  %s168, 2048, %s170, %s157, 128, 64, 4
        $region24: #{tpu_custom_call.1} parent=19 // pred_fallthru
          _
        // Predicated region
        $region25: #{tpu_custom_call.1} parent=19 // pred_check
          %p176 = pneg %p78
        $region26: #{tpu_custom_call.1} parent=19 // pred_check_branch
          %178 = sbr.rel (%p176) target = $region28
        $region27: #{tpu_custom_call.1} parent=19 // pred_region
          %s179 = sand.u32 %s68, 1
          %s180 = scalar_lea.sflag [#allocation7], %s179
          %s181 = sand.u32 %s68, 1
          %s182 = smul.addr %s181, 128
          %s183 = scalar_lea.vmem [#allocation6], %s182
          %s184 = smul.u32 16, %s26
          %s186 = ssub.s32 2048, 2048
          %187 = vsyncadd %s180, %s186
          %s188 = smul.addr %s184, 2
          %s189 = smul.addr %s188, 64
          %s190 = scalar_lea.hbm %s1, %s189
          %s191 = sshll.u32 %s183, 4
          %s192 = int_to_ptr.vmem [resolvable:$true] %s191
          %197 = dma.hbm_to_vmem [thread:$0]  %s190, 2048, %s192, %s180, 128, 128, 8
        $region28: #{tpu_custom_call.1} parent=19 // pred_fallthru
          _
      $region20: #{tpu_custom_call.1} parent=5 // pred_fallthru
        _
      %p198 = scmp.le.s32.totalorder 1, %s18
      %p199 = scmp.lt.s32.totalorder %s18, 5
      %p200 = pnand %p198, %p199
      %p201 = pneg %p200
      // Predicated region
      $region29: #{tpu_custom_call.1} parent=5 // pred_check
        _
      $region30: #{tpu_custom_call.1} parent=5 // pred_check_branch
        %203 = sbr.rel (%p200) target = $region32
      $region31: #{tpu_custom_call.1} parent=5 // pred_region
        %s204 = ssub.s32 %s18, 1
        %s205 = sand.u32 %s45, 1
        %s206 = scalar_lea.sflag [#allocation4], %s205
        %s207 = sand.u32 %s45, 1
        %s208 = smul.addr %s207, 128
        %s209 = scalar_lea.vmem [#allocation3], %s208
        // Predicated region
        $region33: #{tpu_custom_call.1} parent=31 // pred_check
          %p210 = pneg %p58
        $region34: #{tpu_custom_call.1} parent=31 // pred_check_branch
          %212 = sbr.rel (%p210) target = $region36
        $region35: #{tpu_custom_call.1} parent=31 // pred_region
          %213 = dma.done %s206, 2048
        $region36: #{tpu_custom_call.1} parent=31 // pred_fallthru
          _
        %s214 = sand.u32 %s71, 1
        %s215 = scalar_lea.sflag [#allocation7], %s214
        %s216 = sand.u32 %s71, 1
        %s217 = smul.addr %s216, 128
        %s218 = scalar_lea.vmem [#allocation6], %s217
        // Predicated region
        $region37: #{tpu_custom_call.1} parent=31 // pred_check
          %p219 = pneg %p84
        $region38: #{tpu_custom_call.1} parent=31 // pred_check_branch
          %221 = sbr.rel (%p219) target = $region40
        $region39: #{tpu_custom_call.1} parent=31 // pred_region
          %222 = dma.done %s215, 2048
        $region40: #{tpu_custom_call.1} parent=31 // pred_fallthru
          _
        %s223 = sand.u32 %s45, 1
        %s224 = scalar_lea.sflag [#allocation4], %s223
        %s225 = sand.u32 %s45, 1
        %s226 = smul.addr %s225, 128
        %s227 = scalar_lea.vmem [#allocation3], %s226
        %p228 = pneg %p58
        %p229 = pneg %p55
        %s230 = sand.u32 %s71, 1
        %s231 = scalar_lea.sflag [#allocation7], %s230
        %s232 = sand.u32 %s71, 1
        %s233 = smul.addr %s232, 128
        %s234 = scalar_lea.vmem [#allocation6], %s233
        %p235 = pneg %p84
        %p236 = pneg %p81
        %p237 = pneg %p105
        %p238 = pneg %p102
        %p239 = pneg %p131
        %p240 = pneg %p128
        %s241 = sand.u32 %s118, 1
        %s242 = scalar_lea.sflag [#allocation5], %s241
        %s243 = sand.u32 %s118, 1
        %s244 = smul.addr %s243, 256
        %s245 = scalar_lea.vmem [#allocation8], %s244
        %s246 = smul.u32 32, %s27
        %s247 = smul.u32 16, %s28
        %s248 = smul.u32 32, %s27
        %p250 = scmp.eq.s32.totalorder %s28, 0
        // Predicated region
        $region41: #{tpu_custom_call.1} parent=31 // pred_check
          %p251 = pneg %p250
        $region42: #{tpu_custom_call.1} parent=31 // pred_check_branch
          %253 = sbr.rel (%p251) target = $region44
        $region43: #{tpu_custom_call.1} parent=31 // pred_region
          %254 = vst [vmem:[#allocation2] sm:$0xff] 0.0
          %255 = vst [vmem:[#allocation2 + $0x8] sm:$0xff] 0.0
          %256 = vst [vmem:[#allocation2 + $0x10] sm:$0xff] 0.0
          %257 = vst [vmem:[#allocation2 + $0x18] sm:$0xff] 0.0
          %258 = vst [vmem:[#allocation2 + $0x20] sm:$0xff] 0.0
          %259 = vst [vmem:[#allocation2 + $0x28] sm:$0xff] 0.0
          %260 = vst [vmem:[#allocation2 + $0x30] sm:$0xff] 0.0
          %261 = vst [vmem:[#allocation2 + $0x38] sm:$0xff] 0.0
          %262 = vst [vmem:[#allocation2 + $0x40] sm:$0xff] 0.0
          %263 = vst [vmem:[#allocation2 + $0x48] sm:$0xff] 0.0
          %264 = vst [vmem:[#allocation2 + $0x50] sm:$0xff] 0.0
          %265 = vst [vmem:[#allocation2 + $0x58] sm:$0xff] 0.0
          %266 = vst [vmem:[#allocation2 + $0x60] sm:$0xff] 0.0
          %267 = vst [vmem:[#allocation2 + $0x68] sm:$0xff] 0.0
          %268 = vst [vmem:[#allocation2 + $0x70] sm:$0xff] 0.0
          %269 = vst [vmem:[#allocation2 + $0x78] sm:$0xff] 0.0
          %270 = vst [vmem:[#allocation2 + $0x80] sm:$0xff] 0.0
          %271 = vst [vmem:[#allocation2 + $0x88] sm:$0xff] 0.0
          %272 = vst [vmem:[#allocation2 + $0x90] sm:$0xff] 0.0
          %273 = vst [vmem:[#allocation2 + $0x98] sm:$0xff] 0.0
          %274 = vst [vmem:[#allocation2 + $0xa0] sm:$0xff] 0.0
          %275 = vst [vmem:[#allocation2 + $0xa8] sm:$0xff] 0.0
          %276 = vst [vmem:[#allocation2 + $0xb0] sm:$0xff] 0.0
          %277 = vst [vmem:[#allocation2 + $0xb8] sm:$0xff] 0.0
          %278 = vst [vmem:[#allocation2 + $0xc0] sm:$0xff] 0.0
          %279 = vst [vmem:[#allocation2 + $0xc8] sm:$0xff] 0.0
          %280 = vst [vmem:[#allocation2 + $0xd0] sm:$0xff] 0.0
          %281 = vst [vmem:[#allocation2 + $0xd8] sm:$0xff] 0.0
          %282 = vst [vmem:[#allocation2 + $0xe0] sm:$0xff] 0.0
          %283 = vst [vmem:[#allocation2 + $0xe8] sm:$0xff] 0.0
          %284 = vst [vmem:[#allocation2 + $0xf0] sm:$0xff] 0.0
          %285 = vst [vmem:[#allocation2 + $0xf8] sm:$0xff] 0.0
          %286 = vst [vmem:[#allocation2 + $0x100] sm:$0xff] 0.0
          %287 = vst [vmem:[#allocation2 + $0x108] sm:$0xff] 0.0
          %288 = vst [vmem:[#allocation2 + $0x110] sm:$0xff] 0.0
          %289 = vst [vmem:[#allocation2 + $0x118] sm:$0xff] 0.0
          %290 = vst [vmem:[#allocation2 + $0x120] sm:$0xff] 0.0
          %291 = vst [vmem:[#allocation2 + $0x128] sm:$0xff] 0.0
          %292 = vst [vmem:[#allocation2 + $0x130] sm:$0xff] 0.0
          %293 = vst [vmem:[#allocation2 + $0x138] sm:$0xff] 0.0
          %294 = vst [vmem:[#allocation2 + $0x140] sm:$0xff] 0.0
          %295 = vst [vmem:[#allocation2 + $0x148] sm:$0xff] 0.0
          %296 = vst [vmem:[#allocation2 + $0x150] sm:$0xff] 0.0
          %297 = vst [vmem:[#allocation2 + $0x158] sm:$0xff] 0.0
          %298 = vst [vmem:[#allocation2 + $0x160] sm:$0xff] 0.0
          %299 = vst [vmem:[#allocation2 + $0x168] sm:$0xff] 0.0
          %300 = vst [vmem:[#allocation2 + $0x170] sm:$0xff] 0.0
          %301 = vst [vmem:[#allocation2 + $0x178] sm:$0xff] 0.0
          %302 = vst [vmem:[#allocation2 + $0x180] sm:$0xff] 0.0
          %303 = vst [vmem:[#allocation2 + $0x188] sm:$0xff] 0.0
          %304 = vst [vmem:[#allocation2 + $0x190] sm:$0xff] 0.0
          %305 = vst [vmem:[#allocation2 + $0x198] sm:$0xff] 0.0
          %306 = vst [vmem:[#allocation2 + $0x1a0] sm:$0xff] 0.0
          %307 = vst [vmem:[#allocation2 + $0x1a8] sm:$0xff] 0.0
          %308 = vst [vmem:[#allocation2 + $0x1b0] sm:$0xff] 0.0
          %309 = vst [vmem:[#allocation2 + $0x1b8] sm:$0xff] 0.0
          %310 = vst [vmem:[#allocation2 + $0x1c0] sm:$0xff] 0.0
          %311 = vst [vmem:[#allocation2 + $0x1c8] sm:$0xff] 0.0
          %312 = vst [vmem:[#allocation2 + $0x1d0] sm:$0xff] 0.0
          %313 = vst [vmem:[#allocation2 + $0x1d8] sm:$0xff] 0.0
          %314 = vst [vmem:[#allocation2 + $0x1e0] sm:$0xff] 0.0
          %315 = vst [vmem:[#allocation2 + $0x1e8] sm:$0xff] 0.0
          %316 = vst [vmem:[#allocation2 + $0x1f0] sm:$0xff] 0.0
          %317 = vst [vmem:[#allocation2 + $0x1f8] sm:$0xff] 0.0
        $region44: #{tpu_custom_call.1} parent=31 // pred_fallthru
          _
        %v318 = vld [vmem:[#allocation2] sm:$0xff]
        %v319 = vld [vmem:[#allocation2 + $0x8] sm:$0xff]
        %v320 = vld [vmem:[#allocation2 + $0x10] sm:$0xff]
        %v321 = vld [vmem:[#allocation2 + $0x18] sm:$0xff]
        %v322 = vld [vmem:[#allocation2 + $0x20] sm:$0xff]
        %v323 = vld [vmem:[#allocation2 + $0x28] sm:$0xff]
        %v324 = vld [vmem:[#allocation2 + $0x30] sm:$0xff]
        %v325 = vld [vmem:[#allocation2 + $0x38] sm:$0xff]
        %v326 = vld [vmem:[#allocation2 + $0x40] sm:$0xff]
        %v327 = vld [vmem:[#allocation2 + $0x48] sm:$0xff]
        %v328 = vld [vmem:[#allocation2 + $0x50] sm:$0xff]
        %v329 = vld [vmem:[#allocation2 + $0x58] sm:$0xff]
        %v330 = vld [vmem:[#allocation2 + $0x60] sm:$0xff]
        %v331 = vld [vmem:[#allocation2 + $0x68] sm:$0xff]
        %v332 = vld [vmem:[#allocation2 + $0x70] sm:$0xff]
        %v333 = vld [vmem:[#allocation2 + $0x78] sm:$0xff]
        %v334 = vld [vmem:[#allocation2 + $0x80] sm:$0xff]
        %v335 = vld [vmem:[#allocation2 + $0x88] sm:$0xff]
        %v336 = vld [vmem:[#allocation2 + $0x90] sm:$0xff]
        %v337 = vld [vmem:[#allocation2 + $0x98] sm:$0xff]
        %v338 = vld [vmem:[#allocation2 + $0xa0] sm:$0xff]
        %v339 = vld [vmem:[#allocation2 + $0xa8] sm:$0xff]
        %v340 = vld [vmem:[#allocation2 + $0xb0] sm:$0xff]
        %v341 = vld [vmem:[#allocation2 + $0xb8] sm:$0xff]
        %v342 = vld [vmem:[#allocation2 + $0xc0] sm:$0xff]
        %v343 = vld [vmem:[#allocation2 + $0xc8] sm:$0xff]
        %v344 = vld [vmem:[#allocation2 + $0xd0] sm:$0xff]
        %v345 = vld [vmem:[#allocation2 + $0xd8] sm:$0xff]
        %v346 = vld [vmem:[#allocation2 + $0xe0] sm:$0xff]
        %v347 = vld [vmem:[#allocation2 + $0xe8] sm:$0xff]
        %v348 = vld [vmem:[#allocation2 + $0xf0] sm:$0xff]
        %v349 = vld [vmem:[#allocation2 + $0xf8] sm:$0xff]
        %v350 = vld [vmem:[#allocation2 + $0x100] sm:$0xff]
        %v351 = vld [vmem:[#allocation2 + $0x108] sm:$0xff]
        %v352 = vld [vmem:[#allocation2 + $0x110] sm:$0xff]
        %v353 = vld [vmem:[#allocation2 + $0x118] sm:$0xff]
        %v354 = vld [vmem:[#allocation2 + $0x120] sm:$0xff]
        %v355 = vld [vmem:[#allocation2 + $0x128] sm:$0xff]
        %v356 = vld [vmem:[#allocation2 + $0x130] sm:$0xff]
        %v357 = vld [vmem:[#allocation2 + $0x138] sm:$0xff]
        %v358 = vld [vmem:[#allocation2 + $0x140] sm:$0xff]
        %v359 = vld [vmem:[#allocation2 + $0x148] sm:$0xff]
        %v360 = vld [vmem:[#allocation2 + $0x150] sm:$0xff]
        %v361 = vld [vmem:[#allocation2 + $0x158] sm:$0xff]
        %v362 = vld [vmem:[#allocation2 + $0x160] sm:$0xff]
        %v363 = vld [vmem:[#allocation2 + $0x168] sm:$0xff]
        %v364 = vld [vmem:[#allocation2 + $0x170] sm:$0xff]
        %v365 = vld [vmem:[#allocation2 + $0x178] sm:$0xff]
        %v366 = vld [vmem:[#allocation2 + $0x180] sm:$0xff]
        %v367 = vld [vmem:[#allocation2 + $0x188] sm:$0xff]
        %v368 = vld [vmem:[#allocation2 + $0x190] sm:$0xff]
        %v369 = vld [vmem:[#allocation2 + $0x198] sm:$0xff]
        %v370 = vld [vmem:[#allocation2 + $0x1a0] sm:$0xff]
        %v371 = vld [vmem:[#allocation2 + $0x1a8] sm:$0xff]
        %v372 = vld [vmem:[#allocation2 + $0x1b0] sm:$0xff]
        %v373 = vld [vmem:[#allocation2 + $0x1b8] sm:$0xff]
        %v374 = vld [vmem:[#allocation2 + $0x1c0] sm:$0xff]
        %v375 = vld [vmem:[#allocation2 + $0x1c8] sm:$0xff]
        %v376 = vld [vmem:[#allocation2 + $0x1d0] sm:$0xff]
        %v377 = vld [vmem:[#allocation2 + $0x1d8] sm:$0xff]
        %v378 = vld [vmem:[#allocation2 + $0x1e0] sm:$0xff]
        %v379 = vld [vmem:[#allocation2 + $0x1e8] sm:$0xff]
        %v380 = vld [vmem:[#allocation2 + $0x1f0] sm:$0xff]
        %v381 = vld [vmem:[#allocation2 + $0x1f8] sm:$0xff]
        %v382 = vld [vmem:[%s209] sm:$0xf]
        %v383 = vld [vmem:[%s209 + $0x4] sm:$0xf]
        %v384 = vld [vmem:[%s209 + $0x8] sm:$0xf]
        %v385 = vld [vmem:[%s209 + $0xc] sm:$0xf]
        %v386 = vld [vmem:[%s209 + $0x10] sm:$0xf]
        %v387 = vld [vmem:[%s209 + $0x14] sm:$0xf]
        %v388 = vld [vmem:[%s209 + $0x18] sm:$0xf]
        %v389 = vld [vmem:[%s209 + $0x1c] sm:$0xf]
        %v390 = vld [vmem:[%s209 + $0x20] sm:$0xf]
        %v391 = vld [vmem:[%s209 + $0x24] sm:$0xf]
        %v392 = vld [vmem:[%s209 + $0x28] sm:$0xf]
        %v393 = vld [vmem:[%s209 + $0x2c] sm:$0xf]
        %v394 = vld [vmem:[%s209 + $0x30] sm:$0xf]
        %v395 = vld [vmem:[%s209 + $0x34] sm:$0xf]
        %v396 = vld [vmem:[%s209 + $0x38] sm:$0xf]
        %v397 = vld [vmem:[%s209 + $0x3c] sm:$0xf]
        %v398 = vld [vmem:[%s209 + $0x40] sm:$0xf]
        %v399 = vld [vmem:[%s209 + $0x44] sm:$0xf]
        %v400 = vld [vmem:[%s209 + $0x48] sm:$0xf]
        %v401 = vld [vmem:[%s209 + $0x4c] sm:$0xf]
        %v402 = vld [vmem:[%s209 + $0x50] sm:$0xf]
        %v403 = vld [vmem:[%s209 + $0x54] sm:$0xf]
        %v404 = vld [vmem:[%s209 + $0x58] sm:$0xf]
        %v405 = vld [vmem:[%s209 + $0x5c] sm:$0xf]
        %v406 = vld [vmem:[%s209 + $0x60] sm:$0xf]
        %v407 = vld [vmem:[%s209 + $0x64] sm:$0xf]
        %v408 = vld [vmem:[%s209 + $0x68] sm:$0xf]
        %v409 = vld [vmem:[%s209 + $0x6c] sm:$0xf]
        %v410 = vld [vmem:[%s209 + $0x70] sm:$0xf]
        %v411 = vld [vmem:[%s209 + $0x74] sm:$0xf]
        %v412 = vld [vmem:[%s209 + $0x78] sm:$0xf]
        %v413 = vld [vmem:[%s209 + $0x7c] sm:$0xf]
        %v414 = vld [vmem:[%s218] sm:$0xff]
        %v415 = vld [vmem:[%s218 + $0x8] sm:$0xff]
        %v416 = vld [vmem:[%s218 + $0x10] sm:$0xff]
        %v417 = vld [vmem:[%s218 + $0x18] sm:$0xff]
        %v418 = vld [vmem:[%s218 + $0x20] sm:$0xff]
        %v419 = vld [vmem:[%s218 + $0x28] sm:$0xff]
        %v420 = vld [vmem:[%s218 + $0x30] sm:$0xff]
        %v421 = vld [vmem:[%s218 + $0x38] sm:$0xff]
        %v422 = vld [vmem:[%s218 + $0x40] sm:$0xff]
        %v423 = vld [vmem:[%s218 + $0x48] sm:$0xff]
        %v424 = vld [vmem:[%s218 + $0x50] sm:$0xff]
        %v425 = vld [vmem:[%s218 + $0x58] sm:$0xff]
        %v426 = vld [vmem:[%s218 + $0x60] sm:$0xff]
        %v427 = vld [vmem:[%s218 + $0x68] sm:$0xff]
        %v428 = vld [vmem:[%s218 + $0x70] sm:$0xff]
        %v429 = vld [vmem:[%s218 + $0x78] sm:$0xff]
        %v462 = vunpack.c.l.b16 %v382
        %v463 = vunpack.c.l.b16 %v383
        %v464 = vunpack.c.l.b16 %v384
        %v465 = vunpack.c.l.b16 %v385
        %v466 = vunpack.c.l.b16 %v386
        %v467 = vunpack.c.l.b16 %v387
        %v468 = vunpack.c.l.b16 %v388
        %v469 = vunpack.c.l.b16 %v389
        %v470 = vunpack.c.l.b16 %v390
        %v471 = vunpack.c.l.b16 %v391
        %v472 = vunpack.c.l.b16 %v392
        %v473 = vunpack.c.l.b16 %v393
        %v474 = vunpack.c.l.b16 %v394
        %v475 = vunpack.c.l.b16 %v395
        %v476 = vunpack.c.l.b16 %v396
        %v477 = vunpack.c.l.b16 %v397
        %v478 = vunpack.c.l.b16 %v398
        %v479 = vunpack.c.l.b16 %v399
        %v480 = vunpack.c.l.b16 %v400
        %v481 = vunpack.c.l.b16 %v401
        %v482 = vunpack.c.l.b16 %v402
        %v483 = vunpack.c.l.b16 %v403
        %v484 = vunpack.c.l.b16 %v404
        %v485 = vunpack.c.l.b16 %v405
        %v486 = vunpack.c.l.b16 %v406
        %v487 = vunpack.c.l.b16 %v407
        %v488 = vunpack.c.l.b16 %v408
        %v489 = vunpack.c.l.b16 %v409
        %v490 = vunpack.c.l.b16 %v410
        %v491 = vunpack.c.l.b16 %v411
        %v492 = vunpack.c.l.b16 %v412
        %v493 = vunpack.c.l.b16 %v413
        %v494 = vpack.c.b16 %v463, %v462
        %v495 = vpack.c.b16 %v465, %v464
        %v496 = vpack.c.b16 %v467, %v466
        %v497 = vpack.c.b16 %v469, %v468
        %v498 = vpack.c.b16 %v471, %v470
        %v499 = vpack.c.b16 %v473, %v472
        %v500 = vpack.c.b16 %v475, %v474
        %v501 = vpack.c.b16 %v477, %v476
        %v502 = vpack.c.b16 %v479, %v478
        %v503 = vpack.c.b16 %v481, %v480
        %v504 = vpack.c.b16 %v483, %v482
        %v505 = vpack.c.b16 %v485, %v484
        %v506 = vpack.c.b16 %v487, %v486
        %v507 = vpack.c.b16 %v489, %v488
        %v508 = vpack.c.b16 %v491, %v490
        %v509 = vpack.c.b16 %v493, %v492
        %v542 = vunpack.c.l.b16 %v414
        %v543 = vunpack.c.h.b16 %v414
        %v544 = vunpack.c.l.b16 %v415
        %v545 = vunpack.c.h.b16 %v415
        %v546 = vunpack.c.l.b16 %v416
        %v547 = vunpack.c.h.b16 %v416
        %v548 = vunpack.c.l.b16 %v417
        %v549 = vunpack.c.h.b16 %v417
        %v550 = vunpack.c.l.b16 %v418
        %v551 = vunpack.c.h.b16 %v418
        %v552 = vunpack.c.l.b16 %v419
        %v553 = vunpack.c.h.b16 %v419
        %v554 = vunpack.c.l.b16 %v420
        %v555 = vunpack.c.h.b16 %v420
        %v556 = vunpack.c.l.b16 %v421
        %v557 = vunpack.c.h.b16 %v421
        %v558 = vunpack.c.l.b16 %v422
        %v559 = vunpack.c.h.b16 %v422
        %v560 = vunpack.c.l.b16 %v423
        %v561 = vunpack.c.h.b16 %v423
        %v562 = vunpack.c.l.b16 %v424
        %v563 = vunpack.c.h.b16 %v424
        %v564 = vunpack.c.l.b16 %v425
        %v565 = vunpack.c.h.b16 %v425
        %v566 = vunpack.c.l.b16 %v426
        %v567 = vunpack.c.h.b16 %v426
        %v568 = vunpack.c.l.b16 %v427
        %v569 = vunpack.c.h.b16 %v427
        %v570 = vunpack.c.l.b16 %v428
        %v571 = vunpack.c.h.b16 %v428
        %v572 = vunpack.c.l.b16 %v429
        %v573 = vunpack.c.h.b16 %v429
        %v574 = vpack.c.b16 %v544, %v542
        %v575 = vpack.c.b16 %v545, %v543
        %v576 = vpack.c.b16 %v548, %v546
        %v577 = vpack.c.b16 %v549, %v547
        %v578 = vpack.c.b16 %v552, %v550
        %v579 = vpack.c.b16 %v553, %v551
        %v580 = vpack.c.b16 %v556, %v554
        %v581 = vpack.c.b16 %v557, %v555
        %v582 = vpack.c.b16 %v560, %v558
        %v583 = vpack.c.b16 %v561, %v559
        %v584 = vpack.c.b16 %v564, %v562
        %v585 = vpack.c.b16 %v565, %v563
        %v586 = vpack.c.b16 %v568, %v566
        %v587 = vpack.c.b16 %v569, %v567
        %v588 = vpack.c.b16 %v572, %v570
        %v589 = vpack.c.b16 %v573, %v571
        %606 = vmatprep.subr.bf16.mxu0 %v575
        %607 = vmatpush1.bf16.msra.mxu0 %v574
        %608 = vmatprep.subr.bf16.mxu0 %v577
        %609 = vmatpush1.bf16.msra.mxu0 %v576
        %610 = vmatprep.subr.bf16.mxu0 %v579
        %611 = vmatpush1.bf16.msra.mxu0 %v578
        %612 = vmatprep.subr.bf16.mxu0 %v581
        %613 = vmatpush1.bf16.msra.mxu0 %v580
        %614 = vmatprep.subr.bf16.mxu0 %v583
        %615 = vmatpush1.bf16.msra.mxu0 %v582
        %616 = vmatprep.subr.bf16.mxu0 %v585
        %617 = vmatpush1.bf16.msra.mxu0 %v584
        %618 = vmatprep.subr.bf16.mxu0 %v587
        %619 = vmatpush1.bf16.msra.mxu0 %v586
        %620 = vmatprep.subr.bf16.mxu0 %v589
        %621 = vmatpush1.bf16.msra.mxu0 %v588
        %622 = vmatprep.subr.bf16.mxu0 0
        %623 = vmatpush1.bf16.msra.mxu0 0
        %624 = vmatprep.subr.bf16.mxu0 0
        %625 = vmatpush1.bf16.msra.mxu0 0
        %626 = vmatprep.subr.bf16.mxu0 0
        %627 = vmatpush1.bf16.msra.mxu0 0
        %628 = vmatprep.subr.bf16.mxu0 0
        %629 = vmatpush1.bf16.msra.mxu0 0
        %630 = vmatprep.subr.bf16.mxu0 0
        %631 = vmatpush1.bf16.msra.mxu0 0
        %632 = vmatprep.subr.bf16.mxu0 0
        %633 = vmatpush1.bf16.msra.mxu0 0
        %634 = vmatprep.subr.bf16.mxu0 0
        %635 = vmatpush1.bf16.msra.mxu0 0
        %636 = vmatprep.subr.bf16.mxu0 0
        %637 = vmatpush1.bf16.msra.mxu0 0
        %638 = vmatprep.mubr.bf16.mxu0 0
        %639 = vmatmul.mubr.bf16.gmra.mrb[0].mxu0 %v494
        %v640 = vpop.f32.mrb[0].mxu0
        %v641 = vadd.f32 0.0, %v640
        %v642 = vpop.f32.mrb[0].mxu0
        %v643 = vadd.f32 0.0, %v642
        %v644 = vpop.f32.mrb[0].mxu0
        %v645 = vadd.f32 0.0, %v644
        %v646 = vpop.f32.mrb[0].mxu0
        %v647 = vadd.f32 0.0, %v646
        %648 = vmatprep.mubr.bf16.mxu0 0
        %649 = vmatmul.mubr.bf16.gmra.mrb[0].mxu0 %v495
        %v650 = vpop.f32.mrb[0].mxu0
        %v651 = vadd.f32 0.0, %v650
        %v652 = vpop.f32.mrb[0].mxu0
        %v653 = vadd.f32 0.0, %v652
        %v654 = vpop.f32.mrb[0].mxu0
        %v655 = vadd.f32 0.0, %v654
        %v656 = vpop.f32.mrb[0].mxu0
        %v657 = vadd.f32 0.0, %v656
        %658 = vmatprep.mubr.bf16.mxu0 0
        %659 = vmatmul.mubr.bf16.gmra.mrb[0].mxu0 %v496
        %v660 = vpop.f32.mrb[0].mxu0
        %v661 = vadd.f32 0.0, %v660
        %v662 = vpop.f32.mrb[0].mxu0
        %v663 = vadd.f32 0.0, %v662
        %v664 = vpop.f32.mrb[0].mxu0
        %v665 = vadd.f32 0.0, %v664
        %v666 = vpop.f32.mrb[0].mxu0
        %v667 = vadd.f32 0.0, %v666
        %668 = vmatprep.mubr.bf16.mxu0 0
        %669 = vmatmul.mubr.bf16.gmra.mrb[0].mxu0 %v497
        %v670 = vpop.f32.mrb[0].mxu0
        %v671 = vadd.f32 0.0, %v670
        %v672 = vpop.f32.mrb[0].mxu0
        %v673 = vadd.f32 0.0, %v672
        %v674 = vpop.f32.mrb[0].mxu0
        %v675 = vadd.f32 0.0, %v674
        %v676 = vpop.f32.mrb[0].mxu0
        %v677 = vadd.f32 0.0, %v676
        %678 = vmatprep.mubr.bf16.mxu0 0
        %679 = vmatmul.mubr.bf16.gmra.mrb[0].mxu0 %v498
        %v680 = vpop.f32.mrb[0].mxu0
        %v681 = vadd.f32 0.0, %v680
        %v682 = vpop.f32.mrb[0].mxu0
        %v683 = vadd.f32 0.0, %v682
        %v684 = vpop.f32.mrb[0].mxu0
        %v685 = vadd.f32 0.0, %v684
        %v686 = vpop.f32.mrb[0].mxu0
        %v687 = vadd.f32 0.0, %v686
        %688 = vmatprep.mubr.bf16.mxu0 0
        %689 = vmatmul.mubr.bf16.gmra.mrb[0].mxu0 %v499
        %v690 = vpop.f32.mrb[0].mxu0
        %v691 = vadd.f32 0.0, %v690
        %v692 = vpop.f32.mrb[0].mxu0
        %v693 = vadd.f32 0.0, %v692
        %v694 = vpop.f32.mrb[0].mxu0
        %v695 = vadd.f32 0.0, %v694
        %v696 = vpop.f32.mrb[0].mxu0
        %v697 = vadd.f32 0.0, %v696
        %698 = vmatprep.mubr.bf16.mxu0 0
        %699 = vmatmul.mubr.bf16.gmra.mrb[0].mxu0 %v500
        %v700 = vpop.f32.mrb[0].mxu0
        %v701 = vadd.f32 0.0, %v700
        %v702 = vpop.f32.mrb[0].mxu0
        %v703 = vadd.f32 0.0, %v702
        %v704 = vpop.f32.mrb[0].mxu0
        %v705 = vadd.f32 0.0, %v704
        %v706 = vpop.f32.mrb[0].mxu0
        %v707 = vadd.f32 0.0, %v706
        %708 = vmatprep.mubr.bf16.mxu0 0
        %709 = vmatmul.mubr.bf16.gmra.mrb[0].mxu0 %v501
        %v710 = vpop.f32.mrb[0].mxu0
        %v711 = vadd.f32 0.0, %v710
        %v712 = vpop.f32.mrb[0].mxu0
        %v713 = vadd.f32 0.0, %v712
        %v714 = vpop.f32.mrb[0].mxu0
        %v715 = vadd.f32 0.0, %v714
        %v716 = vpop.f32.mrb[0].mxu0
        %v717 = vadd.f32 0.0, %v716
        %718 = vmatprep.mubr.bf16.mxu0 0
        %719 = vmatmul.mubr.bf16.gmra.mrb[0].mxu0 %v502
        %v720 = vpop.f32.mrb[0].mxu0
        %v721 = vadd.f32 0.0, %v720
        %v722 = vpop.f32.mrb[0].mxu0
        %v723 = vadd.f32 0.0, %v722
        %v724 = vpop.f32.mrb[0].mxu0
        %v725 = vadd.f32 0.0, %v724
        %v726 = vpop.f32.mrb[0].mxu0
        %v727 = vadd.f32 0.0, %v726
        %728 = vmatprep.mubr.bf16.mxu0 0
        %729 = vmatmul.mubr.bf16.gmra.mrb[0].mxu0 %v503
        %v730 = vpop.f32.mrb[0].mxu0
        %v731 = vadd.f32 0.0, %v730
        %v732 = vpop.f32.mrb[0].mxu0
        %v733 = vadd.f32 0.0, %v732
        %v734 = vpop.f32.mrb[0].mxu0
        %v735 = vadd.f32 0.0, %v734
        %v736 = vpop.f32.mrb[0].mxu0
        %v737 = vadd.f32 0.0, %v736
        %738 = vmatprep.mubr.bf16.mxu0 0
        %739 = vmatmul.mubr.bf16.gmra.mrb[0].mxu0 %v504
        %v740 = vpop.f32.mrb[0].mxu0
        %v741 = vadd.f32 0.0, %v740
        %v742 = vpop.f32.mrb[0].mxu0
        %v743 = vadd.f32 0.0, %v742
        %v744 = vpop.f32.mrb[0].mxu0
        %v745 = vadd.f32 0.0, %v744
        %v746 = vpop.f32.mrb[0].mxu0
        %v747 = vadd.f32 0.0, %v746
        %748 = vmatprep.mubr.bf16.mxu0 0
        %749 = vmatmul.mubr.bf16.gmra.mrb[0].mxu0 %v505
        %v750 = vpop.f32.mrb[0].mxu0
        %v751 = vadd.f32 0.0, %v750
        %v752 = vpop.f32.mrb[0].mxu0
        %v753 = vadd.f32 0.0, %v752
        %v754 = vpop.f32.mrb[0].mxu0
        %v755 = vadd.f32 0.0, %v754
        %v756 = vpop.f32.mrb[0].mxu0
        %v757 = vadd.f32 0.0, %v756
        %758 = vmatprep.mubr.bf16.mxu0 0
        %759 = vmatmul.mubr.bf16.gmra.mrb[0].mxu0 %v506
        %v760 = vpop.f32.mrb[0].mxu0
        %v761 = vadd.f32 0.0, %v760
        %v762 = vpop.f32.mrb[0].mxu0
        %v763 = vadd.f32 0.0, %v762
        %v764 = vpop.f32.mrb[0].mxu0
        %v765 = vadd.f32 0.0, %v764
        %v766 = vpop.f32.mrb[0].mxu0
        %v767 = vadd.f32 0.0, %v766
        %768 = vmatprep.mubr.bf16.mxu0 0
        %769 = vmatmul.mubr.bf16.gmra.mrb[0].mxu0 %v507
        %v770 = vpop.f32.mrb[0].mxu0
        %v771 = vadd.f32 0.0, %v770
        %v772 = vpop.f32.mrb[0].mxu0
        %v773 = vadd.f32 0.0, %v772
        %v774 = vpop.f32.mrb[0].mxu0
        %v775 = vadd.f32 0.0, %v774
        %v776 = vpop.f32.mrb[0].mxu0
        %v777 = vadd.f32 0.0, %v776
        %778 = vmatprep.mubr.bf16.mxu0 0
        %779 = vmatmul.mubr.bf16.gmra.mrb[0].mxu0 %v508
        %v780 = vpop.f32.mrb[0].mxu0
        %v781 = vadd.f32 0.0, %v780
        %v782 = vpop.f32.mrb[0].mxu0
        %v783 = vadd.f32 0.0, %v782
        %v784 = vpop.f32.mrb[0].mxu0
        %v785 = vadd.f32 0.0, %v784
        %v786 = vpop.f32.mrb[0].mxu0
        %v787 = vadd.f32 0.0, %v786
        %788 = vmatprep.mubr.bf16.mxu0 0
        %789 = vmatmul.mubr.bf16.gmra.mrb[0].mxu0 %v509
        %v790 = vpop.f32.mrb[0].mxu0
        %v791 = vadd.f32 0.0, %v790
        %v792 = vpop.f32.mrb[0].mxu0
        %v793 = vadd.f32 0.0, %v792
        %v794 = vpop.f32.mrb[0].mxu0
        %v795 = vadd.f32 0.0, %v794
        %v796 = vpop.f32.mrb[0].mxu0
        %v797 = vadd.f32 0.0, %v796
        %798 = vdwg.mxu0
        %v799 = vadd.f32 %v318, %v641
        %v800 = vadd.f32 %v319, %v643
        %v801 = vadd.f32 %v320, %v645
        %v802 = vadd.f32 %v321, %v647
        %v803 = vadd.f32 %v322, %v651
        %v804 = vadd.f32 %v323, %v653
        %v805 = vadd.f32 %v324, %v655
        %v806 = vadd.f32 %v325, %v657
        %v807 = vadd.f32 %v326, %v661
        %v808 = vadd.f32 %v327, %v663
        %v809 = vadd.f32 %v328, %v665
        %v810 = vadd.f32 %v329, %v667
        %v811 = vadd.f32 %v330, %v671
        %v812 = vadd.f32 %v331, %v673
        %v813 = vadd.f32 %v332, %v675
        %v814 = vadd.f32 %v333, %v677
        %v815 = vadd.f32 %v334, %v681
        %v816 = vadd.f32 %v335, %v683
        %v817 = vadd.f32 %v336, %v685
        %v818 = vadd.f32 %v337, %v687
        %v819 = vadd.f32 %v338, %v691
        %v820 = vadd.f32 %v339, %v693
        %v821 = vadd.f32 %v340, %v695
        %v822 = vadd.f32 %v341, %v697
        %v823 = vadd.f32 %v342, %v701
        %v824 = vadd.f32 %v343, %v703
        %v825 = vadd.f32 %v344, %v705
        %v826 = vadd.f32 %v345, %v707
        %v827 = vadd.f32 %v346, %v711
        %v828 = vadd.f32 %v347, %v713
        %v829 = vadd.f32 %v348, %v715
        %v830 = vadd.f32 %v349, %v717
        %v831 = vadd.f32 %v350, %v721
        %v832 = vadd.f32 %v351, %v723
        %v833 = vadd.f32 %v352, %v725
        %v834 = vadd.f32 %v353, %v727
        %v835 = vadd.f32 %v354, %v731
        %v836 = vadd.f32 %v355, %v733
        %v837 = vadd.f32 %v356, %v735
        %v838 = vadd.f32 %v357, %v737
        %v839 = vadd.f32 %v358, %v741
        %v840 = vadd.f32 %v359, %v743
        %v841 = vadd.f32 %v360, %v745
        %v842 = vadd.f32 %v361, %v747
        %v843 = vadd.f32 %v362, %v751
        %v844 = vadd.f32 %v363, %v753
        %v845 = vadd.f32 %v364, %v755
        %v846 = vadd.f32 %v365, %v757
        %v847 = vadd.f32 %v366, %v761
        %v848 = vadd.f32 %v367, %v763
        %v849 = vadd.f32 %v368, %v765
        %v850 = vadd.f32 %v369, %v767
        %v851 = vadd.f32 %v370, %v771
        %v852 = vadd.f32 %v371, %v773
        %v853 = vadd.f32 %v372, %v775
        %v854 = vadd.f32 %v373, %v777
        %v855 = vadd.f32 %v374, %v781
        %v856 = vadd.f32 %v375, %v783
        %v857 = vadd.f32 %v376, %v785
        %v858 = vadd.f32 %v377, %v787
        %v859 = vadd.f32 %v378, %v791
        %v860 = vadd.f32 %v379, %v793
        %v861 = vadd.f32 %v380, %v795
        %v862 = vadd.f32 %v381, %v797
        %863 = vst [vmem:[#allocation2] sm:$0xff] %v799
        %864 = vst [vmem:[#allocation2 + $0x8] sm:$0xff] %v800
        %865 = vst [vmem:[#allocation2 + $0x10] sm:$0xff] %v801
        %866 = vst [vmem:[#allocation2 + $0x18] sm:$0xff] %v802
        %867 = vst [vmem:[#allocation2 + $0x20] sm:$0xff] %v803
        %868 = vst [vmem:[#allocation2 + $0x28] sm:$0xff] %v804
        %869 = vst [vmem:[#allocation2 + $0x30] sm:$0xff] %v805
        %870 = vst [vmem:[#allocation2 + $0x38] sm:$0xff] %v806
        %871 = vst [vmem:[#allocation2 + $0x40] sm:$0xff] %v807
        %872 = vst [vmem:[#allocation2 + $0x48] sm:$0xff] %v808
        %873 = vst [vmem:[#allocation2 + $0x50] sm:$0xff] %v809
        %874 = vst [vmem:[#allocation2 + $0x58] sm:$0xff] %v810
        %875 = vst [vmem:[#allocation2 + $0x60] sm:$0xff] %v811
        %876 = vst [vmem:[#allocation2 + $0x68] sm:$0xff] %v812
        %877 = vst [vmem:[#allocation2 + $0x70] sm:$0xff] %v813
        %878 = vst [vmem:[#allocation2 + $0x78] sm:$0xff] %v814
        %879 = vst [vmem:[#allocation2 + $0x80] sm:$0xff] %v815
        %880 = vst [vmem:[#allocation2 + $0x88] sm:$0xff] %v816
        %881 = vst [vmem:[#allocation2 + $0x90] sm:$0xff] %v817
        %882 = vst [vmem:[#allocation2 + $0x98] sm:$0xff] %v818
        %883 = vst [vmem:[#allocation2 + $0xa0] sm:$0xff] %v819
        %884 = vst [vmem:[#allocation2 + $0xa8] sm:$0xff] %v820
        %885 = vst [vmem:[#allocation2 + $0xb0] sm:$0xff] %v821
        %886 = vst [vmem:[#allocation2 + $0xb8] sm:$0xff] %v822
        %887 = vst [vmem:[#allocation2 + $0xc0] sm:$0xff] %v823
        %888 = vst [vmem:[#allocation2 + $0xc8] sm:$0xff] %v824
        %889 = vst [vmem:[#allocation2 + $0xd0] sm:$0xff] %v825
        %890 = vst [vmem:[#allocation2 + $0xd8] sm:$0xff] %v826
        %891 = vst [vmem:[#allocation2 + $0xe0] sm:$0xff] %v827
        %892 = vst [vmem:[#allocation2 + $0xe8] sm:$0xff] %v828
        %893 = vst [vmem:[#allocation2 + $0xf0] sm:$0xff] %v829
        %894 = vst [vmem:[#allocation2 + $0xf8] sm:$0xff] %v830
        %895 = vst [vmem:[#allocation2 + $0x100] sm:$0xff] %v831
        %896 = vst [vmem:[#allocation2 + $0x108] sm:$0xff] %v832
        %897 = vst [vmem:[#allocation2 + $0x110] sm:$0xff] %v833
        %898 = vst [vmem:[#allocation2 + $0x118] sm:$0xff] %v834
        %899 = vst [vmem:[#allocation2 + $0x120] sm:$0xff] %v835
        %900 = vst [vmem:[#allocation2 + $0x128] sm:$0xff] %v836
        %901 = vst [vmem:[#allocation2 + $0x130] sm:$0xff] %v837
        %902 = vst [vmem:[#allocation2 + $0x138] sm:$0xff] %v838
        %903 = vst [vmem:[#allocation2 + $0x140] sm:$0xff] %v839
        %904 = vst [vmem:[#allocation2 + $0x148] sm:$0xff] %v840
        %905 = vst [vmem:[#allocation2 + $0x150] sm:$0xff] %v841
        %906 = vst [vmem:[#allocation2 + $0x158] sm:$0xff] %v842
        %907 = vst [vmem:[#allocation2 + $0x160] sm:$0xff] %v843
        %908 = vst [vmem:[#allocation2 + $0x168] sm:$0xff] %v844
        %909 = vst [vmem:[#allocation2 + $0x170] sm:$0xff] %v845
        %910 = vst [vmem:[#allocation2 + $0x178] sm:$0xff] %v846
        %911 = vst [vmem:[#allocation2 + $0x180] sm:$0xff] %v847
        %912 = vst [vmem:[#allocation2 + $0x188] sm:$0xff] %v848
        %913 = vst [vmem:[#allocation2 + $0x190] sm:$0xff] %v849
        %914 = vst [vmem:[#allocation2 + $0x198] sm:$0xff] %v850
        %915 = vst [vmem:[#allocation2 + $0x1a0] sm:$0xff] %v851
        %916 = vst [vmem:[#allocation2 + $0x1a8] sm:$0xff] %v852
        %917 = vst [vmem:[#allocation2 + $0x1b0] sm:$0xff] %v853
        %918 = vst [vmem:[#allocation2 + $0x1b8] sm:$0xff] %v854
        %919 = vst [vmem:[#allocation2 + $0x1c0] sm:$0xff] %v855
        %920 = vst [vmem:[#allocation2 + $0x1c8] sm:$0xff] %v856
        %921 = vst [vmem:[#allocation2 + $0x1d0] sm:$0xff] %v857
        %922 = vst [vmem:[#allocation2 + $0x1d8] sm:$0xff] %v858
        %923 = vst [vmem:[#allocation2 + $0x1e0] sm:$0xff] %v859
        %924 = vst [vmem:[#allocation2 + $0x1e8] sm:$0xff] %v860
        %925 = vst [vmem:[#allocation2 + $0x1f0] sm:$0xff] %v861
        %926 = vst [vmem:[#allocation2 + $0x1f8] sm:$0xff] %v862
        %p927 = scmp.eq.s32.totalorder %s28, 1
        // Predicated region
        $region45: #{tpu_custom_call.1} parent=31 // pred_check
          %p928 = pneg %p927
        $region46: #{tpu_custom_call.1} parent=31 // pred_check_branch
          %930 = sbr.rel (%p928) target = $region48
        $region47: #{tpu_custom_call.1} parent=31 // pred_region
          %v931 = vld [vmem:[#allocation2] sm:$0xff]
          %v932 = vld [vmem:[#allocation2 + $0x8] sm:$0xff]
          %v933 = vld [vmem:[#allocation2 + $0x10] sm:$0xff]
          %v934 = vld [vmem:[#allocation2 + $0x18] sm:$0xff]
          %v935 = vld [vmem:[#allocation2 + $0x20] sm:$0xff]
          %v936 = vld [vmem:[#allocation2 + $0x28] sm:$0xff]
          %v937 = vld [vmem:[#allocation2 + $0x30] sm:$0xff]
          %v938 = vld [vmem:[#allocation2 + $0x38] sm:$0xff]
          %v939 = vld [vmem:[#allocation2 + $0x40] sm:$0xff]
          %v940 = vld [vmem:[#allocation2 + $0x48] sm:$0xff]
          %v941 = vld [vmem:[#allocation2 + $0x50] sm:$0xff]
          %v942 = vld [vmem:[#allocation2 + $0x58] sm:$0xff]
          %v943 = vld [vmem:[#allocation2 + $0x60] sm:$0xff]
          %v944 = vld [vmem:[#allocation2 + $0x68] sm:$0xff]
          %v945 = vld [vmem:[#allocation2 + $0x70] sm:$0xff]
          %v946 = vld [vmem:[#allocation2 + $0x78] sm:$0xff]
          %v947 = vld [vmem:[#allocation2 + $0x80] sm:$0xff]
          %v948 = vld [vmem:[#allocation2 + $0x88] sm:$0xff]
          %v949 = vld [vmem:[#allocation2 + $0x90] sm:$0xff]
          %v950 = vld [vmem:[#allocation2 + $0x98] sm:$0xff]
          %v951 = vld [vmem:[#allocation2 + $0xa0] sm:$0xff]
          %v952 = vld [vmem:[#allocation2 + $0xa8] sm:$0xff]
          %v953 = vld [vmem:[#allocation2 + $0xb0] sm:$0xff]
          %v954 = vld [vmem:[#allocation2 + $0xb8] sm:$0xff]
          %v955 = vld [vmem:[#allocation2 + $0xc0] sm:$0xff]
          %v956 = vld [vmem:[#allocation2 + $0xc8] sm:$0xff]
          %v957 = vld [vmem:[#allocation2 + $0xd0] sm:$0xff]
          %v958 = vld [vmem:[#allocation2 + $0xd8] sm:$0xff]
          %v959 = vld [vmem:[#allocation2 + $0xe0] sm:$0xff]
          %v960 = vld [vmem:[#allocation2 + $0xe8] sm:$0xff]
          %v961 = vld [vmem:[#allocation2 + $0xf0] sm:$0xff]
          %v962 = vld [vmem:[#allocation2 + $0xf8] sm:$0xff]
          %v963 = vld [vmem:[#allocation2 + $0x100] sm:$0xff]
          %v964 = vld [vmem:[#allocation2 + $0x108] sm:$0xff]
          %v965 = vld [vmem:[#allocation2 + $0x110] sm:$0xff]
          %v966 = vld [vmem:[#allocation2 + $0x118] sm:$0xff]
          %v967 = vld [vmem:[#allocation2 + $0x120] sm:$0xff]
          %v968 = vld [vmem:[#allocation2 + $0x128] sm:$0xff]
          %v969 = vld [vmem:[#allocation2 + $0x130] sm:$0xff]
          %v970 = vld [vmem:[#allocation2 + $0x138] sm:$0xff]
          %v971 = vld [vmem:[#allocation2 + $0x140] sm:$0xff]
          %v972 = vld [vmem:[#allocation2 + $0x148] sm:$0xff]
          %v973 = vld [vmem:[#allocation2 + $0x150] sm:$0xff]
          %v974 = vld [vmem:[#allocation2 + $0x158] sm:$0xff]
          %v975 = vld [vmem:[#allocation2 + $0x160] sm:$0xff]
          %v976 = vld [vmem:[#allocation2 + $0x168] sm:$0xff]
          %v977 = vld [vmem:[#allocation2 + $0x170] sm:$0xff]
          %v978 = vld [vmem:[#allocation2 + $0x178] sm:$0xff]
          %v979 = vld [vmem:[#allocation2 + $0x180] sm:$0xff]
          %v980 = vld [vmem:[#allocation2 + $0x188] sm:$0xff]
          %v981 = vld [vmem:[#allocation2 + $0x190] sm:$0xff]
          %v982 = vld [vmem:[#allocation2 + $0x198] sm:$0xff]
          %v983 = vld [vmem:[#allocation2 + $0x1a0] sm:$0xff]
          %v984 = vld [vmem:[#allocation2 + $0x1a8] sm:$0xff]
          %v985 = vld [vmem:[#allocation2 + $0x1b0] sm:$0xff]
          %v986 = vld [vmem:[#allocation2 + $0x1b8] sm:$0xff]
          %v987 = vld [vmem:[#allocation2 + $0x1c0] sm:$0xff]
          %v988 = vld [vmem:[#allocation2 + $0x1c8] sm:$0xff]
          %v989 = vld [vmem:[#allocation2 + $0x1d0] sm:$0xff]
          %v990 = vld [vmem:[#allocation2 + $0x1d8] sm:$0xff]
          %v991 = vld [vmem:[#allocation2 + $0x1e0] sm:$0xff]
          %v992 = vld [vmem:[#allocation2 + $0x1e8] sm:$0xff]
          %v993 = vld [vmem:[#allocation2 + $0x1f0] sm:$0xff]
          %v994 = vld [vmem:[#allocation2 + $0x1f8] sm:$0xff]
          %v995 = vld [vmem:[%s2] sm:$0x3]
          %v997 = vlaneseq
          %v998 = vshrl.u32 %v997, 7
          %v999 = vsub.s32 0, %v998
          %v1000 = vrot.slane %v995, %v999
          %v1001 = vlaneseq
          %v1002 = vshrl.u32 %v1001, 7
          %v1003 = vsub.s32 1, %v1002
          %v1004 = vrot.slane %v995, %v1003
          %v1007 = vadd.f32 %v931, %v1000
          %v1008 = vadd.f32 %v932, %v1004
          %v1009 = vadd.f32 %v933, %v1000
          %v1010 = vadd.f32 %v934, %v1004
          %v1011 = vadd.f32 %v935, %v1000
          %v1012 = vadd.f32 %v936, %v1004
          %v1013 = vadd.f32 %v937, %v1000
          %v1014 = vadd.f32 %v938, %v1004
          %v1015 = vadd.f32 %v939, %v1000
          %v1016 = vadd.f32 %v940, %v1004
          %v1017 = vadd.f32 %v941, %v1000
          %v1018 = vadd.f32 %v942, %v1004
          %v1019 = vadd.f32 %v943, %v1000
          %v1020 = vadd.f32 %v944, %v1004
          %v1021 = vadd.f32 %v945, %v1000
          %v1022 = vadd.f32 %v946, %v1004
          %v1023 = vadd.f32 %v947, %v1000
          %v1024 = vadd.f32 %v948, %v1004
          %v1025 = vadd.f32 %v949, %v1000
          %v1026 = vadd.f32 %v950, %v1004
          %v1027 = vadd.f32 %v951, %v1000
          %v1028 = vadd.f32 %v952, %v1004
          %v1029 = vadd.f32 %v953, %v1000
          %v1030 = vadd.f32 %v954, %v1004
          %v1031 = vadd.f32 %v955, %v1000
          %v1032 = vadd.f32 %v956, %v1004
          %v1033 = vadd.f32 %v957, %v1000
          %v1034 = vadd.f32 %v958, %v1004
          %v1035 = vadd.f32 %v959, %v1000
          %v1036 = vadd.f32 %v960, %v1004
          %v1037 = vadd.f32 %v961, %v1000
          %v1038 = vadd.f32 %v962, %v1004
          %v1039 = vadd.f32 %v963, %v1000
          %v1040 = vadd.f32 %v964, %v1004
          %v1041 = vadd.f32 %v965, %v1000
          %v1042 = vadd.f32 %v966, %v1004
          %v1043 = vadd.f32 %v967, %v1000
          %v1044 = vadd.f32 %v968, %v1004
          %v1045 = vadd.f32 %v969, %v1000
          %v1046 = vadd.f32 %v970, %v1004
          %v1047 = vadd.f32 %v971, %v1000
          %v1048 = vadd.f32 %v972, %v1004
          %v1049 = vadd.f32 %v973, %v1000
          %v1050 = vadd.f32 %v974, %v1004
          %v1051 = vadd.f32 %v975, %v1000
          %v1052 = vadd.f32 %v976, %v1004
          %v1053 = vadd.f32 %v977, %v1000
          %v1054 = vadd.f32 %v978, %v1004
          %v1055 = vadd.f32 %v979, %v1000
          %v1056 = vadd.f32 %v980, %v1004
          %v1057 = vadd.f32 %v981, %v1000
          %v1058 = vadd.f32 %v982, %v1004
          %v1059 = vadd.f32 %v983, %v1000
          %v1060 = vadd.f32 %v984, %v1004
          %v1061 = vadd.f32 %v985, %v1000
          %v1062 = vadd.f32 %v986, %v1004
          %v1063 = vadd.f32 %v987, %v1000
          %v1064 = vadd.f32 %v988, %v1004
          %v1065 = vadd.f32 %v989, %v1000
          %v1066 = vadd.f32 %v990, %v1004
          %v1067 = vadd.f32 %v991, %v1000
          %v1068 = vadd.f32 %v992, %v1004
          %v1069 = vadd.f32 %v993, %v1000
          %v1070 = vadd.f32 %v994, %v1004
          %v1071 = vpack.c.bf16 %v1009, %v1007
          %v1072 = vpack.c.bf16 %v1010, %v1008
          %v1073 = vpack.c.bf16 %v1013, %v1011
          %v1074 = vpack.c.bf16 %v1014, %v1012
          %v1075 = vpack.c.bf16 %v1017, %v1015
          %v1076 = vpack.c.bf16 %v1018, %v1016
          %v1077 = vpack.c.bf16 %v1021, %v1019
          %v1078 = vpack.c.bf16 %v1022, %v1020
          %v1079 = vpack.c.bf16 %v1025, %v1023
          %v1080 = vpack.c.bf16 %v1026, %v1024
          %v1081 = vpack.c.bf16 %v1029, %v1027
          %v1082 = vpack.c.bf16 %v1030, %v1028
          %v1083 = vpack.c.bf16 %v1033, %v1031
          %v1084 = vpack.c.bf16 %v1034, %v1032
          %v1085 = vpack.c.bf16 %v1037, %v1035
          %v1086 = vpack.c.bf16 %v1038, %v1036
          %v1087 = vpack.c.bf16 %v1041, %v1039
          %v1088 = vpack.c.bf16 %v1042, %v1040
          %v1089 = vpack.c.bf16 %v1045, %v1043
          %v1090 = vpack.c.bf16 %v1046, %v1044
          %v1091 = vpack.c.bf16 %v1049, %v1047
          %v1092 = vpack.c.bf16 %v1050, %v1048
          %v1093 = vpack.c.bf16 %v1053, %v1051
          %v1094 = vpack.c.bf16 %v1054, %v1052
          %v1095 = vpack.c.bf16 %v1057, %v1055
          %v1096 = vpack.c.bf16 %v1058, %v1056
          %v1097 = vpack.c.bf16 %v1061, %v1059
          %v1098 = vpack.c.bf16 %v1062, %v1060
          %v1099 = vpack.c.bf16 %v1065, %v1063
          %v1100 = vpack.c.bf16 %v1066, %v1064
          %v1101 = vpack.c.bf16 %v1069, %v1067
          %v1102 = vpack.c.bf16 %v1070, %v1068
          %v1135 = vunpack.c.l.b16 %v1071
          %v1136 = vunpack.c.l.b16 %v1072
          %v1137 = vunpack.c.h.b16 %v1071
          %v1138 = vunpack.c.h.b16 %v1072
          %v1139 = vunpack.c.l.b16 %v1073
          %v1140 = vunpack.c.l.b16 %v1074
          %v1141 = vunpack.c.h.b16 %v1073
          %v1142 = vunpack.c.h.b16 %v1074
          %v1143 = vunpack.c.l.b16 %v1075
          %v1144 = vunpack.c.l.b16 %v1076
          %v1145 = vunpack.c.h.b16 %v1075
          %v1146 = vunpack.c.h.b16 %v1076
          %v1147 = vunpack.c.l.b16 %v1077
          %v1148 = vunpack.c.l.b16 %v1078
          %v1149 = vunpack.c.h.b16 %v1077
          %v1150 = vunpack.c.h.b16 %v1078
          %v1151 = vunpack.c.l.b16 %v1079
          %v1152 = vunpack.c.l.b16 %v1080
          %v1153 = vunpack.c.h.b16 %v1079
          %v1154 = vunpack.c.h.b16 %v1080
          %v1155 = vunpack.c.l.b16 %v1081
          %v1156 = vunpack.c.l.b16 %v1082
          %v1157 = vunpack.c.h.b16 %v1081
          %v1158 = vunpack.c.h.b16 %v1082
          %v1159 = vunpack.c.l.b16 %v1083
          %v1160 = vunpack.c.l.b16 %v1084
          %v1161 = vunpack.c.h.b16 %v1083
          %v1162 = vunpack.c.h.b16 %v1084
          %v1163 = vunpack.c.l.b16 %v1085
          %v1164 = vunpack.c.l.b16 %v1086
          %v1165 = vunpack.c.h.b16 %v1085
          %v1166 = vunpack.c.h.b16 %v1086
          %v1167 = vunpack.c.l.b16 %v1087
          %v1168 = vunpack.c.l.b16 %v1088
          %v1169 = vunpack.c.h.b16 %v1087
          %v1170 = vunpack.c.h.b16 %v1088
          %v1171 = vunpack.c.l.b16 %v1089
          %v1172 = vunpack.c.l.b16 %v1090
          %v1173 = vunpack.c.h.b16 %v1089
          %v1174 = vunpack.c.h.b16 %v1090
          %v1175 = vunpack.c.l.b16 %v1091
          %v1176 = vunpack.c.l.b16 %v1092
          %v1177 = vunpack.c.h.b16 %v1091
          %v1178 = vunpack.c.h.b16 %v1092
          %v1179 = vunpack.c.l.b16 %v1093
          %v1180 = vunpack.c.l.b16 %v1094
          %v1181 = vunpack.c.h.b16 %v1093
          %v1182 = vunpack.c.h.b16 %v1094
          %v1183 = vunpack.c.l.b16 %v1095
          %v1184 = vunpack.c.l.b16 %v1096
          %v1185 = vunpack.c.h.b16 %v1095
          %v1186 = vunpack.c.h.b16 %v1096
          %v1187 = vunpack.c.l.b16 %v1097
          %v1188 = vunpack.c.l.b16 %v1098
          %v1189 = vunpack.c.h.b16 %v1097
          %v1190 = vunpack.c.h.b16 %v1098
          %v1191 = vunpack.c.l.b16 %v1099
          %v1192 = vunpack.c.l.b16 %v1100
          %v1193 = vunpack.c.h.b16 %v1099
          %v1194 = vunpack.c.h.b16 %v1100
          %v1195 = vunpack.c.l.b16 %v1101
          %v1196 = vunpack.c.l.b16 %v1102
          %v1197 = vunpack.c.h.b16 %v1101
          %v1198 = vunpack.c.h.b16 %v1102
          %v1199 = vpack.c.b16 %v1136, %v1135
          %v1200 = vpack.c.b16 %v1138, %v1137
          %v1201 = vpack.c.b16 %v1140, %v1139
          %v1202 = vpack.c.b16 %v1142, %v1141
          %v1203 = vpack.c.b16 %v1144, %v1143
          %v1204 = vpack.c.b16 %v1146, %v1145
          %v1205 = vpack.c.b16 %v1148, %v1147
          %v1206 = vpack.c.b16 %v1150, %v1149
          %v1207 = vpack.c.b16 %v1152, %v1151
          %v1208 = vpack.c.b16 %v1154, %v1153
          %v1209 = vpack.c.b16 %v1156, %v1155
          %v1210 = vpack.c.b16 %v1158, %v1157
          %v1211 = vpack.c.b16 %v1160, %v1159
          %v1212 = vpack.c.b16 %v1162, %v1161
          %v1213 = vpack.c.b16 %v1164, %v1163
          %v1214 = vpack.c.b16 %v1166, %v1165
          %v1215 = vpack.c.b16 %v1168, %v1167
          %v1216 = vpack.c.b16 %v1170, %v1169
          %v1217 = vpack.c.b16 %v1172, %v1171
          %v1218 = vpack.c.b16 %v1174, %v1173
          %v1219 = vpack.c.b16 %v1176, %v1175
          %v1220 = vpack.c.b16 %v1178, %v1177
          %v1221 = vpack.c.b16 %v1180, %v1179
          %v1222 = vpack.c.b16 %v1182, %v1181
          %v1223 = vpack.c.b16 %v1184, %v1183
          %v1224 = vpack.c.b16 %v1186, %v1185
          %v1225 = vpack.c.b16 %v1188, %v1187
          %v1226 = vpack.c.b16 %v1190, %v1189
          %v1227 = vpack.c.b16 %v1192, %v1191
          %v1228 = vpack.c.b16 %v1194, %v1193
          %v1229 = vpack.c.b16 %v1196, %v1195
          %v1230 = vpack.c.b16 %v1198, %v1197
          %1263 = vst [vmem:[%s245] sm:$0xff] %v1199
          %1264 = vst [vmem:[%s245 + $0x8] sm:$0xff] %v1200
          %1265 = vst [vmem:[%s245 + $0x10] sm:$0xff] %v1201
          %1266 = vst [vmem:[%s245 + $0x18] sm:$0xff] %v1202
          %1267 = vst [vmem:[%s245 + $0x20] sm:$0xff] %v1203
          %1268 = vst [vmem:[%s245 + $0x28] sm:$0xff] %v1204
          %1269 = vst [vmem:[%s245 + $0x30] sm:$0xff] %v1205
          %1270 = vst [vmem:[%s245 + $0x38] sm:$0xff] %v1206
          %1271 = vst [vmem:[%s245 + $0x40] sm:$0xff] %v1207
          %1272 = vst [vmem:[%s245 + $0x48] sm:$0xff] %v1208
          %1273 = vst [vmem:[%s245 + $0x50] sm:$0xff] %v1209
          %1274 = vst [vmem:[%s245 + $0x58] sm:$0xff] %v1210
          %1275 = vst [vmem:[%s245 + $0x60] sm:$0xff] %v1211
          %1276 = vst [vmem:[%s245 + $0x68] sm:$0xff] %v1212
          %1277 = vst [vmem:[%s245 + $0x70] sm:$0xff] %v1213
          %1278 = vst [vmem:[%s245 + $0x78] sm:$0xff] %v1214
          %1279 = vst [vmem:[%s245 + $0x80] sm:$0xff] %v1215
          %1280 = vst [vmem:[%s245 + $0x88] sm:$0xff] %v1216
          %1281 = vst [vmem:[%s245 + $0x90] sm:$0xff] %v1217
          %1282 = vst [vmem:[%s245 + $0x98] sm:$0xff] %v1218
          %1283 = vst [vmem:[%s245 + $0xa0] sm:$0xff] %v1219
          %1284 = vst [vmem:[%s245 + $0xa8] sm:$0xff] %v1220
          %1285 = vst [vmem:[%s245 + $0xb0] sm:$0xff] %v1221
          %1286 = vst [vmem:[%s245 + $0xb8] sm:$0xff] %v1222
          %1287 = vst [vmem:[%s245 + $0xc0] sm:$0xff] %v1223
          %1288 = vst [vmem:[%s245 + $0xc8] sm:$0xff] %v1224
          %1289 = vst [vmem:[%s245 + $0xd0] sm:$0xff] %v1225
          %1290 = vst [vmem:[%s245 + $0xd8] sm:$0xff] %v1226
          %1291 = vst [vmem:[%s245 + $0xe0] sm:$0xff] %v1227
          %1292 = vst [vmem:[%s245 + $0xe8] sm:$0xff] %v1228
          %1293 = vst [vmem:[%s245 + $0xf0] sm:$0xff] %v1229
          %1294 = vst [vmem:[%s245 + $0xf8] sm:$0xff] %v1230
        $region48: #{tpu_custom_call.1} parent=31 // pred_fallthru
          _
        %s1295 = sand.u32 %s118, 1
        %s1296 = scalar_lea.sflag [#allocation5], %s1295
        %s1297 = sand.u32 %s118, 1
        %s1298 = smul.addr %s1297, 256
        %s1299 = scalar_lea.vmem [#allocation8], %s1298
        // Predicated region
        $region49: #{tpu_custom_call.1} parent=31 // pred_check
          %p1300 = pneg %p128
        $region50: #{tpu_custom_call.1} parent=31 // pred_check_branch
          %1302 = sbr.rel (%p1300) target = $region52
        $region51: #{tpu_custom_call.1} parent=31 // pred_region
          %s1303 = smul.u32 32, %s27
          %s1305 = ssub.s32 4096, 4096
          %1306 = vsyncadd %s1296, %s1305
          %s1307 = smul.addr %s1303, 2
          %s1308 = smul.addr %s1307, 64
          %s1309 = scalar_lea.hbm %s3, %s1308
          %s1310 = sshll.u32 %s1299, 4
          %s1311 = int_to_ptr.vmem [resolvable:$true] %s1310
          %1316 = dma.vmem_to_hbm [thread:$0]  %s1311, 4096, %s1309, %s1296, 128, 128, 8
        $region52: #{tpu_custom_call.1} parent=31 // pred_fallthru
          _
      $region32: #{tpu_custom_call.1} parent=5 // pred_fallthru
        _
      %p1317 = scmp.le.s32.totalorder 2, %s18
      // Predicated region
      $region53: #{tpu_custom_call.1} parent=5 // pred_check
        %p1318 = pneg %p1317
      $region54: #{tpu_custom_call.1} parent=5 // pred_check_branch
        %1320 = sbr.rel (%p1318) target = $region56
      $region55: #{tpu_custom_call.1} parent=5 // pred_region
        %s1321 = ssub.s32 %s18, 2
        // Predicated region
        $region57: #{tpu_custom_call.1} parent=55 // pred_check
          %p1322 = pneg %p134
        $region58: #{tpu_custom_call.1} parent=55 // pred_check_branch
          %1324 = sbr.rel (%p1322) target = $region60
        $region59: #{tpu_custom_call.1} parent=55 // pred_region
          %s1325 = sand.u32 %s119, 1
          %s1326 = scalar_lea.sflag [#allocation5], %s1325
          %s1327 = sand.u32 %s119, 1
          %s1328 = smul.addr %s1327, 256
          %s1329 = scalar_lea.vmem [#allocation8], %s1328
          %1330 = dma.done %s1326, 4096
        $region60: #{tpu_custom_call.1} parent=55 // pred_fallthru
          _
      $region56: #{tpu_custom_call.1} parent=5 // pred_fallthru
        _
    $region6: #{tpu_custom_call.1} parent=1 // loop_footer
      %s22 = sadd.s32 1, %s18
    $region7: #{tpu_custom_call.1} parent=1 // loop_footer_branch
      %17 = sbr.rel target = $region3
    $region8: #{tpu_custom_call.1} parent=1 // loop_exit
      _
    %1331 = vsyncpa [#allocation4], 1
    %s1332 = scalar_lea.sflag [#allocation4], 1
    %1333 = vsyncpa %s1332, 1
    %1334 = vsyncpa [#allocation7], 1
    %s1335 = scalar_lea.sflag [#allocation7], 1
    %1336 = vsyncpa %s1335, 1
    %1337 = vsyncpa [#allocation5], 1
    %s1338 = scalar_lea.sflag [#allocation5], 1
    %1339 = vsyncpa %s1338, 1

</llo_original>
